<compile_context>
chip_gen: v5e
topology: v5e:2x2
jax: 0.10.0
libtpu: 0.0.40
codegen_flags: <defaults>
</compile_context>

<pallas_src>
import functools

import jax
import jax.numpy as jnp
from jax.experimental import pallas as pl
from jax.experimental.pallas import tpu as pltpu


def bottleneck_kernel(x_ref, w1_ref, b1_ref, w2_ref, b2_ref,
                      mask_l_ref, mask_r_ref, o_ref, pad_ref,
                      *, H, W, add):
    f32 = jnp.float32
    x = x_ref[0]                                            # (H*W, C1)

    def silu(y):
        # y * sigmoid(y); reciprocal on the EUP (approx), exp on the EUP too.
        return y * pl.reciprocal(1.0 + jnp.exp(-y), approx=True)

    # cv1: 1x1 conv (BN folded into weight/bias) + SiLU  -> one matmul
    y1 = jnp.dot(x, w1_ref[...], preferred_element_type=f32) + b1_ref[...]
    y1 = silu(y1)                                           # (H*W, C_)

    # Zero-padded flat plane: H padding handled by zero rows, W edges by masks.
    base = 8 + W                                            # 8-row slop keeps the big store aligned
    pad_ref[...] = jnp.zeros_like(pad_ref)
    pad_ref[base:base + H * W, :] = y1

    # im2col: 9 shifted windows -> (H*W, 9*C_)
    cols = []
    for dy in range(3):
        for dx in range(3):
            start = base + (dy - 1) * W + (dx - 1)
            win = pad_ref[start:start + H * W, :]
            if dx == 0:
                win = win * mask_l_ref[...]
            elif dx == 2:
                win = win * mask_r_ref[...]
            cols.append(win)
    cols = jnp.concatenate(cols, axis=-1)                   # minor-dim concat

    # cv2: 3x3 conv (BN folded) as ONE matmul + SiLU
    y2 = jnp.dot(cols, w2_ref[...], preferred_element_type=f32) + b2_ref[...]
    y2 = silu(y2)                                           # (H*W, C2)

    if add:
        y2 = y2 + x
    o_ref[0] = y2.astype(o_ref.dtype)


def bottleneck(x_nchw, w1_k, b1_k, w2_k, b2_k, mask_l, mask_r, add):
    B, C1, H, W = x_nchw.shape
    Cm = w1_k.shape[1]
    C2 = w2_k.shape[1]

    x = jnp.transpose(x_nchw, (0, 2, 3, 1)).reshape(B, H * W, C1)   # NHWC, flat spatial
    pad_rows = 16 + (H + 2) * W                                     # 8-row slop each side

    kern = functools.partial(bottleneck_kernel, H=H, W=W, add=add)
    out = pl.pallas_call(
        kern,
        out_shape=jax.ShapeDtypeStruct((B, H * W, C2), x.dtype),
        grid=(B,),
        in_specs=[
            pl.BlockSpec((1, H * W, C1), lambda b: (b, 0, 0)),      # x slab (per batch)
            pl.BlockSpec((C1, Cm), lambda b: (0, 0)),               # cv1 weight (folded)
            pl.BlockSpec((1, Cm), lambda b: (0, 0)),                # cv1 bias   (folded)
            pl.BlockSpec((9 * Cm, C2), lambda b: (0, 0)),           # cv2 weight (im2col layout)
            pl.BlockSpec((1, C2), lambda b: (0, 0)),                # cv2 bias   (folded)
            pl.BlockSpec((H * W, 1), lambda b: (0, 0)),             # left-edge mask
            pl.BlockSpec((H * W, 1), lambda b: (0, 0)),             # right-edge mask
        ],
        out_specs=pl.BlockSpec((1, H * W, C2), lambda b: (b, 0, 0)),
        scratch_shapes=[pltpu.VMEM((pad_rows, Cm), jnp.float32)],
        compiler_params=pltpu.CompilerParams(
            dimension_semantics=("parallel",)),
    )(x, w1_k, b1_k, w2_k, b2_k, mask_l, mask_r)
    return jnp.transpose(out.reshape(B, H, W, C2), (0, 3, 1, 2))    # back to NCHW


def fold_bn(conv_w, gamma, beta, mean, var, eps=1e-5):
    """Fold eval-mode BatchNorm into the preceding bias-free conv (trace-time)."""
    scale = gamma / jnp.sqrt(var + eps)
    w = conv_w * scale[:, None, None, None]
    b = beta - mean * scale
    return w, b


def reference(x, w1, g1, bb1, m1, v1, w2, g2, bb2, m2, v2, add, eps=1e-5):
    """Pure-JAX reference matching PyTorch Bottleneck (eval mode) semantics."""
    dn = ("NCHW", "OIHW", "NCHW")

    def bn(y, g, b, m, v):
        sh = (1, -1, 1, 1)
        return (y - m.reshape(sh)) / jnp.sqrt(v.reshape(sh) + eps) * g.reshape(sh) + b.reshape(sh)

    def silu(y):
        return y * jax.nn.sigmoid(y)

    y = jax.lax.conv_general_dilated(x, w1, (1, 1), "SAME", dimension_numbers=dn)
    y = silu(bn(y, g1, bb1, m1, v1))
    y = jax.lax.conv_general_dilated(y, w2, (1, 1), "SAME", dimension_numbers=dn)
    y = silu(bn(y, g2, bb2, m2, v2))
    return x + y if add else y


if __name__ == "__main__":
    B, C1, C2, H, W = 2, 4, 4, 16, 16
    E = 0.5
    Cm = int(C2 * E)
    shortcut, groups = True, 1   # TODO(synk): grouped 3x3 conv (g > 1) not implemented; default g=1 only.
    add = shortcut and C1 == C2

    key = jax.random.PRNGKey(0)
    ks = jax.random.split(key, 11)
    x = jax.random.normal(ks[0], (B, C1, H, W), jnp.float32)

    # PyTorch parameter shapes: Conv2d weight (out, in, kh, kw), BatchNorm2d vectors (out,)
    w1_raw = jax.random.normal(ks[1], (Cm, C1, 1, 1), jnp.float32) * 0.5
    g1 = 1.0 + 0.1 * jax.random.normal(ks[2], (Cm,), jnp.float32)
    bb1 = 0.1 * jax.random.normal(ks[3], (Cm,), jnp.float32)
    m1 = 0.1 * jax.random.normal(ks[4], (Cm,), jnp.float32)
    v1 = jnp.abs(jax.random.normal(ks[5], (Cm,), jnp.float32)) + 0.5

    w2_raw = jax.random.normal(ks[6], (C2, Cm, 3, 3), jnp.float32) * 0.3
    g2 = 1.0 + 0.1 * jax.random.normal(ks[7], (C2,), jnp.float32)
    bb2 = 0.1 * jax.random.normal(ks[8], (C2,), jnp.float32)
    m2 = 0.1 * jax.random.normal(ks[9], (C2,), jnp.float32)
    v2 = jnp.abs(jax.random.normal(ks[10], (C2,), jnp.float32)) + 0.5

    # Fold BatchNorm (eval mode) into conv weights/bias -- wrapper-side algebraic fusion.
    w1f, b1f = fold_bn(w1_raw, g1, bb1, m1, v1)
    w2f, b2f = fold_bn(w2_raw, g2, bb2, m2, v2)

    # Kernel layouts: (in, out) weights; cv2 rows ordered (dy, dx, c_in) to match im2col.
    w1_k = jnp.transpose(w1f[:, :, 0, 0], (1, 0))                   # (C1, Cm)
    b1_k = b1f.reshape(1, Cm)
    w2_k = jnp.transpose(w2f, (2, 3, 1, 0)).reshape(9 * Cm, C2)     # (9*Cm, C2)
    b2_k = b2f.reshape(1, C2)

    # W-edge masks for the flat im2col windows (constant, computed once outside kernel).
    col = jnp.arange(H * W, dtype=jnp.int32) % W
    mask_l = (col != 0).astype(jnp.float32).reshape(H * W, 1)
    mask_r = (col != W - 1).astype(jnp.float32).reshape(H * W, 1)

    out = bottleneck(x, w1_k, b1_k, w2_k, b2_k, mask_l, mask_r, add)
    out = jax.block_until_ready(out)

    ref = reference(x, w1_raw, g1, bb1, m1, v1, w2_raw, g2, bb2, m2, v2, add)
    assert out.shape == x.shape
    err = float(jnp.max(jnp.abs(out - ref)))
    assert jnp.allclose(out, ref, atol=2e-2, rtol=2e-2), err
    print("KERNEL_OK")
</pallas_src>

<mosaic_0001>
module attributes {stable_mosaic.version = 11 : i64} {
  func.func @bottleneck_kernel(%arg0: i32, %arg1: memref<1x256x4xf32, #tpu.memory_space<vmem>>, %arg2: memref<4x2xf32, #tpu.memory_space<vmem>>, %arg3: memref<1x2xf32, #tpu.memory_space<vmem>>, %arg4: memref<18x4xf32, #tpu.memory_space<vmem>>, %arg5: memref<1x4xf32, #tpu.memory_space<vmem>>, %arg6: memref<256x1xf32, #tpu.memory_space<vmem>>, %arg7: memref<256x1xf32, #tpu.memory_space<vmem>>, %arg8: memref<1x256x4xf32, #tpu.memory_space<vmem>>, %arg9: memref<304x2xf32, #tpu.memory_space<vmem>>) attributes {dimension_semantics = [#tpu.dimension_semantics<parallel>], iteration_bounds = array<i64: 2>, scalar_prefetch = 0 : i64, scratch_operands = 1 : i64, tpu.core_type = #tpu.core_type<tc>, window_params = [{transform_indices = @transform_0, window_bounds = array<i64: 1, 256, 4>}, {pipeline_mode = #tpu.pipeline_mode<synchronous>, transform_indices = @transform_1, window_bounds = array<i64: 4, 2>}, {pipeline_mode = #tpu.pipeline_mode<synchronous>, transform_indices = @transform_2, window_bounds = array<i64: 1, 2>}, {pipeline_mode = #tpu.pipeline_mode<synchronous>, transform_indices = @transform_3, window_bounds = array<i64: 18, 4>}, {pipeline_mode = #tpu.pipeline_mode<synchronous>, transform_indices = @transform_4, window_bounds = array<i64: 1, 4>}, {pipeline_mode = #tpu.pipeline_mode<synchronous>, transform_indices = @transform_5, window_bounds = array<i64: 256, 1>}, {pipeline_mode = #tpu.pipeline_mode<synchronous>, transform_indices = @transform_6, window_bounds = array<i64: 256, 1>}, {transform_indices = @transform_7, window_bounds = array<i64: 1, 256, 4>}]} {
    %c0 = arith.constant 0 : index
    %c0_0 = arith.constant 0 : index
    %c0_1 = arith.constant 0 : index
    %0 = vector.load %arg1[%c0, %c0_0, %c0_1] : memref<1x256x4xf32, #tpu.memory_space<vmem>>, vector<1x256x4xf32>
    %1 = vector.shape_cast %0 : vector<1x256x4xf32> to vector<256x4xf32>
    %c0_2 = arith.constant 0 : index
    %c0_3 = arith.constant 0 : index
    %2 = vector.load %arg2[%c0_2, %c0_3] : memref<4x2xf32, #tpu.memory_space<vmem>>, vector<4x2xf32>
    %cst = arith.constant dense<0.000000e+00> : vector<256x2xf32>
    %3 = tpu.matmul %1, %2, %cst {dimension_numbers = #tpu.dot_dimension_numbers<[1], [0], [0], [1], [0, 0, 1, 1], [], []>} : vector<256x4xf32>, vector<4x2xf32>, vector<256x2xf32> -> vector<256x2xf32>
    %c0_4 = arith.constant 0 : index
    %c0_5 = arith.constant 0 : index
    %4 = vector.load %arg3[%c0_4, %c0_5] : memref<1x2xf32, #tpu.memory_space<vmem>>, vector<1x2xf32>
    %5 = vector.broadcast %4 : vector<1x2xf32> to vector<256x2xf32>
    %6 = arith.addf %3, %5 : vector<256x2xf32>
    %cst_6 = arith.constant 0.000000e+00 : f32
    %7 = vector.broadcast %cst_6 : f32 to vector<256x2xf32>
    %8 = arith.subf %7, %6 : vector<256x2xf32>
    %9 = math.exp %8 : vector<256x2xf32>
    %cst_7 = arith.constant 1.000000e+00 : f32
    %10 = vector.broadcast %cst_7 : f32 to vector<256x2xf32>
    %11 = arith.addf %10, %9 : vector<256x2xf32>
    %12 = tpu.reciprocal %11 {approx = true} : vector<256x2xf32> -> vector<256x2xf32>
    %13 = arith.mulf %6, %12 : vector<256x2xf32>
    %cst_8 = arith.constant 0.000000e+00 : f32
    %14 = vector.broadcast %cst_8 : f32 to vector<304x2xf32>
    %c0_9 = arith.constant 0 : index
    %c0_10 = arith.constant 0 : index
    %15 = vector.load %arg9[%c0_9, %c0_10] : memref<304x2xf32, #tpu.memory_space<vmem>>, vector<304x2xf32>
    tpu.vector_store %arg9[%c0_9, %c0_10], %14 {strides = array<i32>} : memref<304x2xf32, #tpu.memory_space<vmem>>, vector<304x2xf32>,
    %c24 = arith.constant 24 : index
    %c0_11 = arith.constant 0 : index
    %16 = vector.load %arg9[%c24, %c0_11] : memref<304x2xf32, #tpu.memory_space<vmem>>, vector<256x2xf32>
    tpu.vector_store %arg9[%c24, %c0_11], %13 {strides = array<i32>} : memref<304x2xf32, #tpu.memory_space<vmem>>, vector<256x2xf32>,
    %c7 = arith.constant 7 : index
    %c0_12 = arith.constant 0 : index
    %17 = vector.load %arg9[%c7, %c0_12] : memref<304x2xf32, #tpu.memory_space<vmem>>, vector<256x2xf32>
    %c0_13 = arith.constant 0 : index
    %c0_14 = arith.constant 0 : index
    %18 = vector.load %arg6[%c0_13, %c0_14] : memref<256x1xf32, #tpu.memory_space<vmem>>, vector<256x1xf32>
    %19 = vector.broadcast %18 : vector<256x1xf32> to vector<256x2xf32>
    %20 = arith.mulf %17, %19 : vector<256x2xf32>
    %c8 = arith.constant 8 : index
    %c0_15 = arith.constant 0 : index
    %21 = vector.load %arg9[%c8, %c0_15] : memref<304x2xf32, #tpu.memory_space<vmem>>, vector<256x2xf32>
    %c9 = arith.constant 9 : index
    %c0_16 = arith.constant 0 : index
    %22 = vector.load %arg9[%c9, %c0_16] : memref<304x2xf32, #tpu.memory_space<vmem>>, vector<256x2xf32>
    %c0_17 = arith.constant 0 : index
    %c0_18 = arith.constant 0 : index
    %23 = vector.load %arg7[%c0_17, %c0_18] : memref<256x1xf32, #tpu.memory_space<vmem>>, vector<256x1xf32>
    %24 = vector.broadcast %23 : vector<256x1xf32> to vector<256x2xf32>
    %25 = arith.mulf %22, %24 : vector<256x2xf32>
    %c23 = arith.constant 23 : index
    %c0_19 = arith.constant 0 : index
    %26 = vector.load %arg9[%c23, %c0_19] : memref<304x2xf32, #tpu.memory_space<vmem>>, vector<256x2xf32>
    %c0_20 = arith.constant 0 : index
    %c0_21 = arith.constant 0 : index
    %27 = vector.load %arg6[%c0_20, %c0_21] : memref<256x1xf32, #tpu.memory_space<vmem>>, vector<256x1xf32>
    %28 = vector.broadcast %27 : vector<256x1xf32> to vector<256x2xf32>
    %29 = arith.mulf %26, %28 : vector<256x2xf32>
    %c24_22 = arith.constant 24 : index
    %c0_23 = arith.constant 0 : index
    %30 = vector.load %arg9[%c24_22, %c0_23] : memref<304x2xf32, #tpu.memory_space<vmem>>, vector<256x2xf32>
    %c25 = arith.constant 25 : index
    %c0_24 = arith.constant 0 : index
    %31 = vector.load %arg9[%c25, %c0_24] : memref<304x2xf32, #tpu.memory_space<vmem>>, vector<256x2xf32>
    %c0_25 = arith.constant 0 : index
    %c0_26 = arith.constant 0 : index
    %32 = vector.load %arg7[%c0_25, %c0_26] : memref<256x1xf32, #tpu.memory_space<vmem>>, vector<256x1xf32>
    %33 = vector.broadcast %32 : vector<256x1xf32> to vector<256x2xf32>
    %34 = arith.mulf %31, %33 : vector<256x2xf32>
    %c39 = arith.constant 39 : index
    %c0_27 = arith.constant 0 : index
    %35 = vector.load %arg9[%c39, %c0_27] : memref<304x2xf32, #tpu.memory_space<vmem>>, vector<256x2xf32>
    %c0_28 = arith.constant 0 : index
    %c0_29 = arith.constant 0 : index
    %36 = vector.load %arg6[%c0_28, %c0_29] : memref<256x1xf32, #tpu.memory_space<vmem>>, vector<256x1xf32>
    %37 = vector.broadcast %36 : vector<256x1xf32> to vector<256x2xf32>
    %38 = arith.mulf %35, %37 : vector<256x2xf32>
    %c40 = arith.constant 40 : index
    %c0_30 = arith.constant 0 : index
    %39 = vector.load %arg9[%c40, %c0_30] : memref<304x2xf32, #tpu.memory_space<vmem>>, vector<256x2xf32>
    %c41 = arith.constant 41 : index
    %c0_31 = arith.constant 0 : index
    %40 = vector.load %arg9[%c41, %c0_31] : memref<304x2xf32, #tpu.memory_space<vmem>>, vector<256x2xf32>
    %c0_32 = arith.constant 0 : index
    %c0_33 = arith.constant 0 : index
    %41 = vector.load %arg7[%c0_32, %c0_33] : memref<256x1xf32, #tpu.memory_space<vmem>>, vector<256x1xf32>
    %42 = vector.broadcast %41 : vector<256x1xf32> to vector<256x2xf32>
    %43 = arith.mulf %40, %42 : vector<256x2xf32>
    %44 = tpu.concatenate %20, %21, %25, %29, %30, %34, %38, %39, %43 in 1 : vector<256x2xf32>, vector<256x2xf32>, vector<256x2xf32>, vector<256x2xf32>, vector<256x2xf32>, vector<256x2xf32>, vector<256x2xf32>, vector<256x2xf32>, vector<256x2xf32> -> vector<256x18xf32>
    %c0_34 = arith.constant 0 : index
    %c0_35 = arith.constant 0 : index
    %45 = vector.load %arg4[%c0_34, %c0_35] : memref<18x4xf32, #tpu.memory_space<vmem>>, vector<18x4xf32>
    %cst_36 = arith.constant dense<0.000000e+00> : vector<256x4xf32>
    %46 = tpu.matmul %44, %45, %cst_36 {dimension_numbers = #tpu.dot_dimension_numbers<[1], [0], [0], [1], [0, 0, 1, 1], [], []>} : vector<256x18xf32>, vector<18x4xf32>, vector<256x4xf32> -> vector<256x4xf32>
    %c0_37 = arith.constant 0 : index
    %c0_38 = arith.constant 0 : index
    %47 = vector.load %arg5[%c0_37, %c0_38] : memref<1x4xf32, #tpu.memory_space<vmem>>, vector<1x4xf32>
    %48 = vector.broadcast %47 : vector<1x4xf32> to vector<256x4xf32>
    %49 = arith.addf %46, %48 : vector<256x4xf32>
    %cst_39 = arith.constant 0.000000e+00 : f32
    %50 = vector.broadcast %cst_39 : f32 to vector<256x4xf32>
    %51 = arith.subf %50, %49 : vector<256x4xf32>
    %52 = math.exp %51 : vector<256x4xf32>
    %cst_40 = arith.constant 1.000000e+00 : f32
    %53 = vector.broadcast %cst_40 : f32 to vector<256x4xf32>
    %54 = arith.addf %53, %52 : vector<256x4xf32>
    %55 = tpu.reciprocal %54 {approx = true} : vector<256x4xf32> -> vector<256x4xf32>
    %56 = arith.mulf %49, %55 : vector<256x4xf32>
    %57 = arith.addf %56, %1 : vector<256x4xf32>
    %c0_41 = arith.constant 0 : index
    %c0_42 = arith.constant 0 : index
    %c0_43 = arith.constant 0 : index
    %58 = vector.load %arg8[%c0_41, %c0_42, %c0_43] : memref<1x256x4xf32, #tpu.memory_space<vmem>>, vector<1x256x4xf32>
    %59 = vector.shape_cast %58 : vector<1x256x4xf32> to vector<256x4xf32>
    %60 = vector.shape_cast %57 : vector<256x4xf32> to vector<1x256x4xf32>
    tpu.vector_store %arg8[%c0_41, %c0_42, %c0_43], %60 {strides = array<i32>} : memref<1x256x4xf32, #tpu.memory_space<vmem>>, vector<1x256x4xf32>,
    return
  }
  func.func @transform_0(%arg0: i32) -> (i32, i32, i32) {
    %c0_i32 = arith.constant 0 : i32
    %c0_i32_0 = arith.constant 0 : i32
    %c0_i32_1 = arith.constant 0 : i32
    return %arg0, %c0_i32, %c0_i32_0 : i32, i32, i32
  }
  func.func @transform_1(%arg0: i32) -> (i32, i32) {
    %c0_i32 = arith.constant 0 : i32
    %c0_i32_0 = arith.constant 0 : i32
    %c0_i32_1 = arith.constant 0 : i32
    return %c0_i32, %c0_i32_0 : i32, i32
  }
  func.func @transform_2(%arg0: i32) -> (i32, i32) {
    %c0_i32 = arith.constant 0 : i32
    %c0_i32_0 = arith.constant 0 : i32
    %c0_i32_1 = arith.constant 0 : i32
    return %c0_i32, %c0_i32_0 : i32, i32
  }
  func.func @transform_3(%arg0: i32) -> (i32, i32) {
    %c0_i32 = arith.constant 0 : i32
    %c0_i32_0 = arith.constant 0 : i32
    %c0_i32_1 = arith.constant 0 : i32
    return %c0_i32, %c0_i32_0 : i32, i32
  }
  func.func @transform_4(%arg0: i32) -> (i32, i32) {
    %c0_i32 = arith.constant 0 : i32
    %c0_i32_0 = arith.constant 0 : i32
    %c0_i32_1 = arith.constant 0 : i32
    return %c0_i32, %c0_i32_0 : i32, i32
  }
  func.func @transform_5(%arg0: i32) -> (i32, i32) {
    %c0_i32 = arith.constant 0 : i32
    %c0_i32_0 = arith.constant 0 : i32
    %c0_i32_1 = arith.constant 0 : i32
    return %c0_i32, %c0_i32_0 : i32, i32
  }
  func.func @transform_6(%arg0: i32) -> (i32, i32) {
    %c0_i32 = arith.constant 0 : i32
    %c0_i32_0 = arith.constant 0 : i32
    %c0_i32_1 = arith.constant 0 : i32
    return %c0_i32, %c0_i32_0 : i32, i32
  }
  func.func @transform_7(%arg0: i32) -> (i32, i32, i32) {
    %c0_i32 = arith.constant 0 : i32
    %c0_i32_0 = arith.constant 0 : i32
    %c0_i32_1 = arith.constant 0 : i32
    return %arg0, %c0_i32, %c0_i32_0 : i32, i32, i32
  }
}

</mosaic_0001>

<llo_original>
// kernel: tpu_custom_call.1
$region0: #{tpu_custom_call.1}
  #allocation0 [shape = 'u32[]', space=smem, size = 0x4, offset = 0x4, fixed_abs, tag = 'smem constant byte address 0x4 - core index']
  #allocation1 [shape = 'u32[72,128]{1,0:T(1,128)}', space=vmem, size = 0x9000, scoped, tag = 'internal scratch']
  #allocation2 [shape = 'f32[304,2]{1,0:T(8,128)}', space=vmem, size = 0x26000, scoped, tag = 'scratch operand']
  %s0 = inlined_call_operand.vmem [shape: f32[2,256,4], index: 0, kind: input, shape index: {}]
  %s1 = inlined_call_operand.vmem [shape: f32[4,2], index: 1, kind: input, shape index: {}]
  %s2 = inlined_call_operand.vmem [shape: f32[1,2], index: 2, kind: input, shape index: {}]
  %s3 = inlined_call_operand.vmem [shape: f32[18,4], index: 3, kind: input, shape index: {}]
  %s4 = inlined_call_operand.vmem [shape: f32[1,4], index: 4, kind: input, shape index: {}]
  %s5 = inlined_call_operand.vmem [shape: f32[256,1], index: 5, kind: input, shape index: {}]
  %s6 = inlined_call_operand.vmem [shape: f32[256,1], index: 6, kind: input, shape index: {}]
  %s7 = inlined_call_operand.vmem [shape: f32[2,256,4], index: 7, kind: output, shape index: {}]
  %s8 = sld [smem:[#allocation0]]
  $region61: #{tpu_custom_call.1} parent=0
    _
  %s10 = ssub.s32 1, %s8
  %s11 = scalar_select 0, %s10, %s8
  loop: start=0, step=1, limit=4
  $region2: #{tpu_custom_call.1} parent=0 // loop_pre_header
    _
  $region3: #{tpu_custom_call.1} parent=0 // loop_header
    %s13 = sphi 0, %s17
    %p14 = scmp.ge.s32.totalorder %s13, 4
    %s23 = sphi 0, %s25
    %s26 = sphi 0, %s23
    %s27 = sphi 0, %s26
    %s43 = sphi 0, %s27
    %s47 = sphi 0, %s47
    %s49 = sphi 0, %s47
    %s50 = sphi 0, %s49
    %s64 = sphi 0, %s50
    %s68 = sphi 0, %s68
    %s70 = sphi 0, %s68
    %s71 = sphi 0, %s70
    %s85 = sphi 0, %s71
    %s89 = sphi 0, %s89
    %s91 = sphi 0, %s89
    %s92 = sphi 0, %s91
    %s106 = sphi 0, %s92
    %s110 = sphi 0, %s110
    %s112 = sphi 0, %s110
    %s113 = sphi 0, %s112
    %s127 = sphi 0, %s113
    %s131 = sphi 0, %s131
    %s133 = sphi 0, %s131
    %s134 = sphi 0, %s133
    %s148 = sphi 0, %s134
    %s152 = sphi 0, %s152
    %s154 = sphi 0, %s152
    %s155 = sphi 0, %s154
    %s169 = sphi 0, %s155
    %s175 = sphi 0, %s177
    %s178 = sphi 0, %s175
    %s179 = sphi 0, %s178
    %s195 = sphi 0, %s179
  $region4: #{tpu_custom_call.1} parent=0 // loop_header_branch
    %16 = sbr.rel (%p14) target = $region8
  $region5: #{tpu_custom_call.1} parent=0 // loop_body
    %s18 = ssub.s32 %s13, 1
    %s19 = ssub.s32 %s13, 2
    %s20 = sadd.s32 %s13, 1
    %s21 = ssub.s32 %s13, %s20
    %p22 = scmp.eq.s32.totalorder %s21, 0
    %s24 = sadd.s32 %s23, 1
    %s25 = scalar_select %p22, %s23, %s24
    %p28 = pneg %p22
    %p29 = scmp.eq.s32.totalorder %s13, 1
    %p30 = por %p28, %p29
    %p31 = scmp.ne.s32.totalorder %s23, %s26
    %p32 = scmp.eq.s32.totalorder %s13, 0
    %p33 = por %p31, %p32
    %p34 = scmp.ne.s32.totalorder %s23, %s26
    %p35 = scmp.eq.s32.totalorder %s18, 1
    %p36 = por %p34, %p35
    %p37 = scmp.ne.s32.totalorder %s26, %s27
    %p38 = scmp.eq.s32.totalorder %s18, 0
    %p39 = por %p37, %p38
    %p40 = scmp.ne.s32.totalorder %s26, %s27
    %p41 = scmp.eq.s32.totalorder %s19, 1
    %p42 = por %p40, %p41
    %p44 = scmp.ne.s32.totalorder %s27, %s43
    %p45 = scmp.eq.s32.totalorder %s19, 0
    %p46 = por %p44, %p45
    %s48 = sadd.s32 %s47, 1
    %p51 = scmp.eq.s32.totalorder %s13, 1
    %p52 = scmp.ne.s32.totalorder %s47, %s49
    %p53 = scmp.eq.s32.totalorder %s13, 0
    %p54 = por %p52, %p53
    %p55 = scmp.ne.s32.totalorder %s47, %s49
    %p56 = scmp.eq.s32.totalorder %s18, 1
    %p57 = por %p55, %p56
    %p58 = scmp.ne.s32.totalorder %s49, %s50
    %p59 = scmp.eq.s32.totalorder %s18, 0
    %p60 = por %p58, %p59
    %p61 = scmp.ne.s32.totalorder %s49, %s50
    %p62 = scmp.eq.s32.totalorder %s19, 1
    %p63 = por %p61, %p62
    %p65 = scmp.ne.s32.totalorder %s50, %s64
    %p66 = scmp.eq.s32.totalorder %s19, 0
    %p67 = por %p65, %p66
    %s69 = sadd.s32 %s68, 1
    %p72 = scmp.eq.s32.totalorder %s13, 1
    %p73 = scmp.ne.s32.totalorder %s68, %s70
    %p74 = scmp.eq.s32.totalorder %s13, 0
    %p75 = por %p73, %p74
    %p76 = scmp.ne.s32.totalorder %s68, %s70
    %p77 = scmp.eq.s32.totalorder %s18, 1
    %p78 = por %p76, %p77
    %p79 = scmp.ne.s32.totalorder %s70, %s71
    %p80 = scmp.eq.s32.totalorder %s18, 0
    %p81 = por %p79, %p80
    %p82 = scmp.ne.s32.totalorder %s70, %s71
    %p83 = scmp.eq.s32.totalorder %s19, 1
    %p84 = por %p82, %p83
    %p86 = scmp.ne.s32.totalorder %s71, %s85
    %p87 = scmp.eq.s32.totalorder %s19, 0
    %p88 = por %p86, %p87
    %s90 = sadd.s32 %s89, 1
    %p93 = scmp.eq.s32.totalorder %s13, 1
    %p94 = scmp.ne.s32.totalorder %s89, %s91
    %p95 = scmp.eq.s32.totalorder %s13, 0
    %p96 = por %p94, %p95
    %p97 = scmp.ne.s32.totalorder %s89, %s91
    %p98 = scmp.eq.s32.totalorder %s18, 1
    %p99 = por %p97, %p98
    %p100 = scmp.ne.s32.totalorder %s91, %s92
    %p101 = scmp.eq.s32.totalorder %s18, 0
    %p102 = por %p100, %p101
    %p103 = scmp.ne.s32.totalorder %s91, %s92
    %p104 = scmp.eq.s32.totalorder %s19, 1
    %p105 = por %p103, %p104
    %p107 = scmp.ne.s32.totalorder %s92, %s106
    %p108 = scmp.eq.s32.totalorder %s19, 0
    %p109 = por %p107, %p108
    %s111 = sadd.s32 %s110, 1
    %p114 = scmp.eq.s32.totalorder %s13, 1
    %p115 = scmp.ne.s32.totalorder %s110, %s112
    %p116 = scmp.eq.s32.totalorder %s13, 0
    %p117 = por %p115, %p116
    %p118 = scmp.ne.s32.totalorder %s110, %s112
    %p119 = scmp.eq.s32.totalorder %s18, 1
    %p120 = por %p118, %p119
    %p121 = scmp.ne.s32.totalorder %s112, %s113
    %p122 = scmp.eq.s32.totalorder %s18, 0
    %p123 = por %p121, %p122
    %p124 = scmp.ne.s32.totalorder %s112, %s113
    %p125 = scmp.eq.s32.totalorder %s19, 1
    %p126 = por %p124, %p125
    %p128 = scmp.ne.s32.totalorder %s113, %s127
    %p129 = scmp.eq.s32.totalorder %s19, 0
    %p130 = por %p128, %p129
    %s132 = sadd.s32 %s131, 1
    %p135 = scmp.eq.s32.totalorder %s13, 1
    %p136 = scmp.ne.s32.totalorder %s131, %s133
    %p137 = scmp.eq.s32.totalorder %s13, 0
    %p138 = por %p136, %p137
    %p139 = scmp.ne.s32.totalorder %s131, %s133
    %p140 = scmp.eq.s32.totalorder %s18, 1
    %p141 = por %p139, %p140
    %p142 = scmp.ne.s32.totalorder %s133, %s134
    %p143 = scmp.eq.s32.totalorder %s18, 0
    %p144 = por %p142, %p143
    %p145 = scmp.ne.s32.totalorder %s133, %s134
    %p146 = scmp.eq.s32.totalorder %s19, 1
    %p147 = por %p145, %p146
    %p149 = scmp.ne.s32.totalorder %s134, %s148
    %p150 = scmp.eq.s32.totalorder %s19, 0
    %p151 = por %p149, %p150
    %s153 = sadd.s32 %s152, 1
    %p156 = scmp.eq.s32.totalorder %s13, 1
    %p157 = scmp.ne.s32.totalorder %s152, %s154
    %p158 = scmp.eq.s32.totalorder %s13, 0
    %p159 = por %p157, %p158
    %p160 = scmp.ne.s32.totalorder %s152, %s154
    %p161 = scmp.eq.s32.totalorder %s18, 1
    %p162 = por %p160, %p161
    %p163 = scmp.ne.s32.totalorder %s154, %s155
    %p164 = scmp.eq.s32.totalorder %s18, 0
    %p165 = por %p163, %p164
    %p166 = scmp.ne.s32.totalorder %s154, %s155
    %p167 = scmp.eq.s32.totalorder %s19, 1
    %p168 = por %p166, %p167
    %p170 = scmp.ne.s32.totalorder %s155, %s169
    %p171 = scmp.eq.s32.totalorder %s19, 0
    %p172 = por %p170, %p171
    %s173 = ssub.s32 %s13, %s20
    %p174 = scmp.eq.s32.totalorder %s173, 0
    %s176 = sadd.s32 %s175, 1
    %s177 = scalar_select %p174, %s175, %s176
    %p180 = pneg %p174
    %p181 = scmp.eq.s32.totalorder %s13, 1
    %p182 = por %p180, %p181
    %p183 = scmp.ne.s32.totalorder %s175, %s178
    %p184 = scmp.eq.s32.totalorder %s13, 0
    %p185 = por %p183, %p184
    %p186 = scmp.ne.s32.totalorder %s175, %s178
    %p187 = scmp.eq.s32.totalorder %s18, 1
    %p188 = por %p186, %p187
    %p189 = scmp.ne.s32.totalorder %s178, %s179
    %p190 = scmp.eq.s32.totalorder %s18, 0
    %p191 = por %p189, %p190
    %p192 = scmp.ne.s32.totalorder %s178, %s179
    %p193 = scmp.eq.s32.totalorder %s19, 1
    %p194 = por %p192, %p193
    %p196 = scmp.ne.s32.totalorder %s179, %s195
    %p197 = scmp.eq.s32.totalorder %s19, 0
    %p198 = por %p196, %p197
    %p199 = scmp.le.s32.totalorder 1, %s13
    %p200 = scmp.lt.s32.totalorder %s13, 3
    %p201 = pnand %p199, %p200
    %p202 = pneg %p201
    // Predicated region
    $region9: #{tpu_custom_call.1} parent=5 // pred_check
      _
    $region10: #{tpu_custom_call.1} parent=5 // pred_check_branch
      %204 = sbr.rel (%p201) target = $region12
    $region11: #{tpu_custom_call.1} parent=5 // pred_region
      %s205 = ssub.s32 %s13, 1
      // Predicated region
      $region13: #{tpu_custom_call.1} parent=11 // pred_check
        %p206 = pneg %p60
      $region14: #{tpu_custom_call.1} parent=11 // pred_check_branch
        %208 = sbr.rel (%p206) target = $region16
      $region15: #{tpu_custom_call.1} parent=11 // pred_region
        _
      $region16: #{tpu_custom_call.1} parent=11 // pred_fallthru
        _
      // Predicated region
      $region17: #{tpu_custom_call.1} parent=11 // pred_check
        %p209 = pneg %p81
      $region18: #{tpu_custom_call.1} parent=11 // pred_check_branch
        %211 = sbr.rel (%p209) target = $region20
      $region19: #{tpu_custom_call.1} parent=11 // pred_region
        _
      $region20: #{tpu_custom_call.1} parent=11 // pred_fallthru
        _
      // Predicated region
      $region21: #{tpu_custom_call.1} parent=11 // pred_check
        %p212 = pneg %p102
      $region22: #{tpu_custom_call.1} parent=11 // pred_check_branch
        %214 = sbr.rel (%p212) target = $region24
      $region23: #{tpu_custom_call.1} parent=11 // pred_region
        _
      $region24: #{tpu_custom_call.1} parent=11 // pred_fallthru
        _
      // Predicated region
      $region25: #{tpu_custom_call.1} parent=11 // pred_check
        %p215 = pneg %p123
      $region26: #{tpu_custom_call.1} parent=11 // pred_check_branch
        %217 = sbr.rel (%p215) target = $region28
      $region27: #{tpu_custom_call.1} parent=11 // pred_region
        _
      $region28: #{tpu_custom_call.1} parent=11 // pred_fallthru
        _
      // Predicated region
      $region29: #{tpu_custom_call.1} parent=11 // pred_check
        %p218 = pneg %p144
      $region30: #{tpu_custom_call.1} parent=11 // pred_check_branch
        %220 = sbr.rel (%p218) target = $region32
      $region31: #{tpu_custom_call.1} parent=11 // pred_region
        _
      $region32: #{tpu_custom_call.1} parent=11 // pred_fallthru
        _
      // Predicated region
      $region33: #{tpu_custom_call.1} parent=11 // pred_check
        %p221 = pneg %p165
      $region34: #{tpu_custom_call.1} parent=11 // pred_check_branch
        %223 = sbr.rel (%p221) target = $region36
      $region35: #{tpu_custom_call.1} parent=11 // pred_region
        _
      $region36: #{tpu_custom_call.1} parent=11 // pred_fallthru
        _
    $region12: #{tpu_custom_call.1} parent=5 // pred_fallthru
      _
    %p224 = scmp.lt.s32.totalorder %s13, 2
    // Predicated region
    $region37: #{tpu_custom_call.1} parent=5 // pred_check
      %p225 = pneg %p224
    $region38: #{tpu_custom_call.1} parent=5 // pred_check_branch
      %227 = sbr.rel (%p225) target = $region40
    $region39: #{tpu_custom_call.1} parent=5 // pred_region
      // Predicated region
      $region41: #{tpu_custom_call.1} parent=39 // pred_check
        %p228 = pneg %p33
      $region42: #{tpu_custom_call.1} parent=39 // pred_check_branch
        %230 = sbr.rel (%p228) target = $region44
      $region43: #{tpu_custom_call.1} parent=39 // pred_region
        %p231 = scmp.lt.s32.totalorder %s13, 1
        %s232 = scalar_select %p231, %s13, 1
        %s233 = smul.addr %s232, 32
        %s234 = smul.addr %s233, 8
        %s235 = scalar_lea.vmem %s0, %s234
      $region44: #{tpu_custom_call.1} parent=39 // pred_fallthru
        _
    $region40: #{tpu_custom_call.1} parent=5 // pred_fallthru
      _
    %p236 = scmp.le.s32.totalorder 1, %s13
    %p237 = scmp.lt.s32.totalorder %s13, 3
    %p238 = pnand %p236, %p237
    %p239 = pneg %p238
    // Predicated region
    $region45: #{tpu_custom_call.1} parent=5 // pred_check
      _
    $region46: #{tpu_custom_call.1} parent=5 // pred_check_branch
      %241 = sbr.rel (%p238) target = $region48
    $region47: #{tpu_custom_call.1} parent=5 // pred_region
      %s242 = ssub.s32 %s13, 1
      %p243 = scmp.lt.s32.totalorder %s18, 1
      %s244 = scalar_select %p243, %s18, 1
      %s245 = smul.addr %s244, 32
      %s246 = smul.addr %s245, 8
      %s247 = scalar_lea.vmem %s0, %s246
      %p248 = pneg %p39
      %p249 = pneg %p36
      %p250 = pneg %p60
      %p251 = pneg %p57
      %p252 = pneg %p81
      %p253 = pneg %p78
      %p254 = pneg %p102
      %p255 = pneg %p99
      %p256 = pneg %p123
      %p257 = pneg %p120
      %p258 = pneg %p144
      %p259 = pneg %p141
      %p260 = pneg %p165
      %p261 = pneg %p162
      %p262 = pneg %p191
      %p263 = pneg %p188
      %p264 = scmp.lt.s32.totalorder %s18, 1
      %s265 = scalar_select %p264, %s18, 1
      %s266 = smul.addr %s265, 32
      %s267 = smul.addr %s266, 8
      %s268 = scalar_lea.vmem %s7, %s267
      %p269 = scmp.lt.s32.totalorder %s18, 1
      %s270 = scalar_select %p269, %s18, 1
      %s271 = smul.addr %s270, 32
      %s272 = smul.addr %s271, 8
      %s273 = scalar_lea.vmem %s0, %s272
      %p274 = scmp.lt.s32.totalorder %s18, 1
      %s275 = scalar_select %p274, %s18, 1
      %s276 = smul.addr %s275, 32
      %s277 = smul.addr %s276, 8
      %s278 = scalar_lea.vmem %s7, %s277
      %v279 = vld [vmem:[%s273] sm:$0xff]
      %v280 = vld [vmem:[%s273 + $0x8] sm:$0xff]
      %v281 = vld [vmem:[%s273 + $0x10] sm:$0xff]
      %v282 = vld [vmem:[%s273 + $0x18] sm:$0xff]
      %v283 = vld [vmem:[%s273 + $0x20] sm:$0xff]
      %v284 = vld [vmem:[%s273 + $0x28] sm:$0xff]
      %v285 = vld [vmem:[%s273 + $0x30] sm:$0xff]
      %v286 = vld [vmem:[%s273 + $0x38] sm:$0xff]
      %v287 = vld [vmem:[%s273 + $0x40] sm:$0xff]
      %v288 = vld [vmem:[%s273 + $0x48] sm:$0xff]
      %v289 = vld [vmem:[%s273 + $0x50] sm:$0xff]
      %v290 = vld [vmem:[%s273 + $0x58] sm:$0xff]
      %v291 = vld [vmem:[%s273 + $0x60] sm:$0xff]
      %v292 = vld [vmem:[%s273 + $0x68] sm:$0xff]
      %v293 = vld [vmem:[%s273 + $0x70] sm:$0xff]
      %v294 = vld [vmem:[%s273 + $0x78] sm:$0xff]
      %v295 = vld [vmem:[%s273 + $0x80] sm:$0xff]
      %v296 = vld [vmem:[%s273 + $0x88] sm:$0xff]
      %v297 = vld [vmem:[%s273 + $0x90] sm:$0xff]
      %v298 = vld [vmem:[%s273 + $0x98] sm:$0xff]
      %v299 = vld [vmem:[%s273 + $0xa0] sm:$0xff]
      %v300 = vld [vmem:[%s273 + $0xa8] sm:$0xff]
      %v301 = vld [vmem:[%s273 + $0xb0] sm:$0xff]
      %v302 = vld [vmem:[%s273 + $0xb8] sm:$0xff]
      %v303 = vld [vmem:[%s273 + $0xc0] sm:$0xff]
      %v304 = vld [vmem:[%s273 + $0xc8] sm:$0xff]
      %v305 = vld [vmem:[%s273 + $0xd0] sm:$0xff]
      %v306 = vld [vmem:[%s273 + $0xd8] sm:$0xff]
      %v307 = vld [vmem:[%s273 + $0xe0] sm:$0xff]
      %v308 = vld [vmem:[%s273 + $0xe8] sm:$0xff]
      %v309 = vld [vmem:[%s273 + $0xf0] sm:$0xff]
      %v310 = vld [vmem:[%s273 + $0xf8] sm:$0xff]
      %v311 = vld [vmem:[%s1] sm:$0xf]
      %v312 = vld [vmem:[%s2] sm:$0x1]
      %v314 = vperm.slane %v312, 0
      %vm316 = vcmask 31744
      %v318 = vsel %vm316, %v279, 0
      %v321 = vsel %vm316, %v280, 0
      %v324 = vsel %vm316, %v281, 0
      %v327 = vsel %vm316, %v282, 0
      %v330 = vsel %vm316, %v283, 0
      %v333 = vsel %vm316, %v284, 0
      %v336 = vsel %vm316, %v285, 0
      %v339 = vsel %vm316, %v286, 0
      %v342 = vsel %vm316, %v287, 0
      %v345 = vsel %vm316, %v288, 0
      %v348 = vsel %vm316, %v289, 0
      %v351 = vsel %vm316, %v290, 0
      %v354 = vsel %vm316, %v291, 0
      %v357 = vsel %vm316, %v292, 0
      %v360 = vsel %vm316, %v293, 0
      %v363 = vsel %vm316, %v294, 0
      %v366 = vsel %vm316, %v295, 0
      %v369 = vsel %vm316, %v296, 0
      %v372 = vsel %vm316, %v297, 0
      %v375 = vsel %vm316, %v298, 0
      %v378 = vsel %vm316, %v299, 0
      %v381 = vsel %vm316, %v300, 0
      %v384 = vsel %vm316, %v301, 0
      %v387 = vsel %vm316, %v302, 0
      %v390 = vsel %vm316, %v303, 0
      %v393 = vsel %vm316, %v304, 0
      %v396 = vsel %vm316, %v305, 0
      %v399 = vsel %vm316, %v306, 0
      %v402 = vsel %vm316, %v307, 0
      %v405 = vsel %vm316, %v308, 0
      %v408 = vsel %vm316, %v309, 0
      %v411 = vsel %vm316, %v310, 0
      %vm413 = vcmask 1043456
      %v415 = vsel %vm413, %v311, 0
      %417 = vmatpush.msra.mxu0 0.0
      %418 = vmatpush.msra.mxu0 0.0
      %419 = vmatpush.msra.mxu0 0.0
      %420 = vmatpush.msra.mxu0 0.0
      %421 = vmatpush.msra.mxu0 0.0
      %422 = vmatpush.msra.mxu0 0.0
      %423 = vmatpush.msra.mxu0 0.0
      %424 = vmatpush.msra.mxu0 0.0
      %425 = vmatpush.msra.mxu0 0.0
      %426 = vmatpush.msra.mxu0 0.0
      %427 = vmatpush.msra.mxu0 0.0
      %428 = vmatpush.msra.mxu0 0.0
      %429 = vmatpush.msra.mxu0 0.0
      %430 = vmatpush.msra.mxu0 0.0
      %431 = vmatpush.msra.mxu0 0.0
      %432 = vmatpush.msra.mxu0 %v415
      %433 = vmatmul.f32.gmra.mxu0 %v318
      %v434 = vpop.f32.mrf.mxu0
      %v435 = vadd.f32 %v314, %v434
      %436 = vmatmul.f32.gmra.mxu0 %v321
      %v437 = vpop.f32.mrf.mxu0
      %v438 = vadd.f32 %v314, %v437
      %439 = vmatmul.f32.gmra.mxu0 %v324
      %v440 = vpop.f32.mrf.mxu0
      %v441 = vadd.f32 %v314, %v440
      %442 = vmatmul.f32.gmra.mxu0 %v327
      %v443 = vpop.f32.mrf.mxu0
      %v444 = vadd.f32 %v314, %v443
      %445 = vmatmul.f32.gmra.mxu0 %v330
      %v446 = vpop.f32.mrf.mxu0
      %v447 = vadd.f32 %v314, %v446
      %448 = vmatmul.f32.gmra.mxu0 %v333
      %v449 = vpop.f32.mrf.mxu0
      %v450 = vadd.f32 %v314, %v449
      %451 = vmatmul.f32.gmra.mxu0 %v336
      %v452 = vpop.f32.mrf.mxu0
      %v453 = vadd.f32 %v314, %v452
      %454 = vmatmul.f32.gmra.mxu0 %v339
      %v455 = vpop.f32.mrf.mxu0
      %v456 = vadd.f32 %v314, %v455
      %457 = vmatmul.f32.gmra.mxu0 %v342
      %v458 = vpop.f32.mrf.mxu0
      %v459 = vadd.f32 %v314, %v458
      %460 = vmatmul.f32.gmra.mxu0 %v345
      %v461 = vpop.f32.mrf.mxu0
      %v462 = vadd.f32 %v314, %v461
      %463 = vmatmul.f32.gmra.mxu0 %v348
      %v464 = vpop.f32.mrf.mxu0
      %v465 = vadd.f32 %v314, %v464
      %466 = vmatmul.f32.gmra.mxu0 %v351
      %v467 = vpop.f32.mrf.mxu0
      %v468 = vadd.f32 %v314, %v467
      %469 = vmatmul.f32.gmra.mxu0 %v354
      %v470 = vpop.f32.mrf.mxu0
      %v471 = vadd.f32 %v314, %v470
      %472 = vmatmul.f32.gmra.mxu0 %v357
      %v473 = vpop.f32.mrf.mxu0
      %v474 = vadd.f32 %v314, %v473
      %475 = vmatmul.f32.gmra.mxu0 %v360
      %v476 = vpop.f32.mrf.mxu0
      %v477 = vadd.f32 %v314, %v476
      %478 = vmatmul.f32.gmra.mxu0 %v363
      %v479 = vpop.f32.mrf.mxu0
      %v480 = vadd.f32 %v314, %v479
      %481 = vmatmul.f32.gmra.mxu0 %v366
      %v482 = vpop.f32.mrf.mxu0
      %v483 = vadd.f32 %v314, %v482
      %484 = vmatmul.f32.gmra.mxu0 %v369
      %v485 = vpop.f32.mrf.mxu0
      %v486 = vadd.f32 %v314, %v485
      %487 = vmatmul.f32.gmra.mxu0 %v372
      %v488 = vpop.f32.mrf.mxu0
      %v489 = vadd.f32 %v314, %v488
      %490 = vmatmul.f32.gmra.mxu0 %v375
      %v491 = vpop.f32.mrf.mxu0
      %v492 = vadd.f32 %v314, %v491
      %493 = vmatmul.f32.gmra.mxu0 %v378
      %v494 = vpop.f32.mrf.mxu0
      %v495 = vadd.f32 %v314, %v494
      %496 = vmatmul.f32.gmra.mxu0 %v381
      %v497 = vpop.f32.mrf.mxu0
      %v498 = vadd.f32 %v314, %v497
      %499 = vmatmul.f32.gmra.mxu0 %v384
      %v500 = vpop.f32.mrf.mxu0
      %v501 = vadd.f32 %v314, %v500
      %502 = vmatmul.f32.gmra.mxu0 %v387
      %v503 = vpop.f32.mrf.mxu0
      %v504 = vadd.f32 %v314, %v503
      %505 = vmatmul.f32.gmra.mxu0 %v390
      %v506 = vpop.f32.mrf.mxu0
      %v507 = vadd.f32 %v314, %v506
      %508 = vmatmul.f32.gmra.mxu0 %v393
      %v509 = vpop.f32.mrf.mxu0
      %v510 = vadd.f32 %v314, %v509
      %511 = vmatmul.f32.gmra.mxu0 %v396
      %v512 = vpop.f32.mrf.mxu0
      %v513 = vadd.f32 %v314, %v512
      %514 = vmatmul.f32.gmra.mxu0 %v399
      %v515 = vpop.f32.mrf.mxu0
      %v516 = vadd.f32 %v314, %v515
      %517 = vmatmul.f32.gmra.mxu0 %v402
      %v518 = vpop.f32.mrf.mxu0
      %v519 = vadd.f32 %v314, %v518
      %520 = vmatmul.f32.gmra.mxu0 %v405
      %v521 = vpop.f32.mrf.mxu0
      %v522 = vadd.f32 %v314, %v521
      %523 = vmatmul.f32.gmra.mxu0 %v408
      %v524 = vpop.f32.mrf.mxu0
      %v525 = vadd.f32 %v314, %v524
      %526 = vmatmul.f32.gmra.mxu0 %v411
      %v527 = vpop.f32.mrf.mxu0
      %v528 = vadd.f32 %v314, %v527
      %529 = vdwg.mxu0
      %v530 = vsub.f32 0.0, %v435
      %v531 = vsub.f32 0.0, %v438
      %v532 = vsub.f32 0.0, %v441
      %v533 = vsub.f32 0.0, %v444
      %v534 = vsub.f32 0.0, %v447
      %v535 = vsub.f32 0.0, %v450
      %v536 = vsub.f32 0.0, %v453
      %v537 = vsub.f32 0.0, %v456
      %v538 = vsub.f32 0.0, %v459
      %v539 = vsub.f32 0.0, %v462
      %v540 = vsub.f32 0.0, %v465
      %v541 = vsub.f32 0.0, %v468
      %v542 = vsub.f32 0.0, %v471
      %v543 = vsub.f32 0.0, %v474
      %v544 = vsub.f32 0.0, %v477
      %v545 = vsub.f32 0.0, %v480
      %v546 = vsub.f32 0.0, %v483
      %v547 = vsub.f32 0.0, %v486
      %v548 = vsub.f32 0.0, %v489
      %v549 = vsub.f32 0.0, %v492
      %v550 = vsub.f32 0.0, %v495
      %v551 = vsub.f32 0.0, %v498
      %v552 = vsub.f32 0.0, %v501
      %v553 = vsub.f32 0.0, %v504
      %v554 = vsub.f32 0.0, %v507
      %v555 = vsub.f32 0.0, %v510
      %v556 = vsub.f32 0.0, %v513
      %v557 = vsub.f32 0.0, %v516
      %v558 = vsub.f32 0.0, %v519
      %v559 = vsub.f32 0.0, %v522
      %v560 = vsub.f32 0.0, %v525
      %v561 = vsub.f32 0.0, %v528
      %v562 = vmul.f32 %v530, 1.442695
      %v563 = vpow.pop %v562
      %v564 = vmul.f32 %v531, 1.442695
      %v565 = vpow.pop %v564
      %v566 = vmul.f32 %v532, 1.442695
      %v567 = vpow.pop %v566
      %v568 = vmul.f32 %v533, 1.442695
      %v569 = vpow.pop %v568
      %v570 = vmul.f32 %v534, 1.442695
      %v571 = vpow.pop %v570
      %v572 = vmul.f32 %v535, 1.442695
      %v573 = vpow.pop %v572
      %v574 = vmul.f32 %v536, 1.442695
      %v575 = vpow.pop %v574
      %v576 = vmul.f32 %v537, 1.442695
      %v577 = vpow.pop %v576
      %v578 = vmul.f32 %v538, 1.442695
      %v579 = vpow.pop %v578
      %v580 = vmul.f32 %v539, 1.442695
      %v581 = vpow.pop %v580
      %v582 = vmul.f32 %v540, 1.442695
      %v583 = vpow.pop %v582
      %v584 = vmul.f32 %v541, 1.442695
      %v585 = vpow.pop %v584
      %v586 = vmul.f32 %v542, 1.442695
      %v587 = vpow.pop %v586
      %v588 = vmul.f32 %v543, 1.442695
      %v589 = vpow.pop %v588
      %v590 = vmul.f32 %v544, 1.442695
      %v591 = vpow.pop %v590
      %v592 = vmul.f32 %v545, 1.442695
      %v593 = vpow.pop %v592
      %v594 = vmul.f32 %v546, 1.442695
      %v595 = vpow.pop %v594
      %v596 = vmul.f32 %v547, 1.442695
      %v597 = vpow.pop %v596
      %v598 = vmul.f32 %v548, 1.442695
      %v599 = vpow.pop %v598
      %v600 = vmul.f32 %v549, 1.442695
      %v601 = vpow.pop %v600
      %v602 = vmul.f32 %v550, 1.442695
      %v603 = vpow.pop %v602
      %v604 = vmul.f32 %v551, 1.442695
      %v605 = vpow.pop %v604
      %v606 = vmul.f32 %v552, 1.442695
      %v607 = vpow.pop %v606
      %v608 = vmul.f32 %v553, 1.442695
      %v609 = vpow.pop %v608
      %v610 = vmul.f32 %v554, 1.442695
      %v611 = vpow.pop %v610
      %v612 = vmul.f32 %v555, 1.442695
      %v613 = vpow.pop %v612
      %v614 = vmul.f32 %v556, 1.442695
      %v615 = vpow.pop %v614
      %v616 = vmul.f32 %v557, 1.442695
      %v617 = vpow.pop %v616
      %v618 = vmul.f32 %v558, 1.442695
      %v619 = vpow.pop %v618
      %v620 = vmul.f32 %v559, 1.442695
      %v621 = vpow.pop %v620
      %v622 = vmul.f32 %v560, 1.442695
      %v623 = vpow.pop %v622
      %v624 = vmul.f32 %v561, 1.442695
      %v625 = vpow.pop %v624
      %v626 = vadd.f32 %v563, 1.0
      %v627 = vadd.f32 %v565, 1.0
      %v628 = vadd.f32 %v567, 1.0
      %v629 = vadd.f32 %v569, 1.0
      %v630 = vadd.f32 %v571, 1.0
      %v631 = vadd.f32 %v573, 1.0
      %v632 = vadd.f32 %v575, 1.0
      %v633 = vadd.f32 %v577, 1.0
      %v634 = vadd.f32 %v579, 1.0
      %v635 = vadd.f32 %v581, 1.0
      %v636 = vadd.f32 %v583, 1.0
      %v637 = vadd.f32 %v585, 1.0
      %v638 = vadd.f32 %v587, 1.0
      %v639 = vadd.f32 %v589, 1.0
      %v640 = vadd.f32 %v591, 1.0
      %v641 = vadd.f32 %v593, 1.0
      %v642 = vadd.f32 %v595, 1.0
      %v643 = vadd.f32 %v597, 1.0
      %v644 = vadd.f32 %v599, 1.0
      %v645 = vadd.f32 %v601, 1.0
      %v646 = vadd.f32 %v603, 1.0
      %v647 = vadd.f32 %v605, 1.0
      %v648 = vadd.f32 %v607, 1.0
      %v649 = vadd.f32 %v609, 1.0
      %v650 = vadd.f32 %v611, 1.0
      %v651 = vadd.f32 %v613, 1.0
      %v652 = vadd.f32 %v615, 1.0
      %v653 = vadd.f32 %v617, 1.0
      %v654 = vadd.f32 %v619, 1.0
      %v655 = vadd.f32 %v621, 1.0
      %v656 = vadd.f32 %v623, 1.0
      %v657 = vadd.f32 %v625, 1.0
      %v658 = vrcp.pop %v626
      %v659 = vrcp.pop %v627
      %v660 = vrcp.pop %v628
      %v661 = vrcp.pop %v629
      %v662 = vrcp.pop %v630
      %v663 = vrcp.pop %v631
      %v664 = vrcp.pop %v632
      %v665 = vrcp.pop %v633
      %v666 = vrcp.pop %v634
      %v667 = vrcp.pop %v635
      %v668 = vrcp.pop %v636
      %v669 = vrcp.pop %v637
      %v670 = vrcp.pop %v638
      %v671 = vrcp.pop %v639
      %v672 = vrcp.pop %v640
      %v673 = vrcp.pop %v641
      %v674 = vrcp.pop %v642
      %v675 = vrcp.pop %v643
      %v676 = vrcp.pop %v644
      %v677 = vrcp.pop %v645
      %v678 = vrcp.pop %v646
      %v679 = vrcp.pop %v647
      %v680 = vrcp.pop %v648
      %v681 = vrcp.pop %v649
      %v682 = vrcp.pop %v650
      %v683 = vrcp.pop %v651
      %v684 = vrcp.pop %v652
      %v685 = vrcp.pop %v653
      %v686 = vrcp.pop %v654
      %v687 = vrcp.pop %v655
      %v688 = vrcp.pop %v656
      %v689 = vrcp.pop %v657
      %v690 = vmul.f32 %v435, %v658
      %v691 = vmul.f32 %v438, %v659
      %v692 = vmul.f32 %v441, %v660
      %v693 = vmul.f32 %v444, %v661
      %v694 = vmul.f32 %v447, %v662
      %v695 = vmul.f32 %v450, %v663
      %v696 = vmul.f32 %v453, %v664
      %v697 = vmul.f32 %v456, %v665
      %v698 = vmul.f32 %v459, %v666
      %v699 = vmul.f32 %v462, %v667
      %v700 = vmul.f32 %v465, %v668
      %v701 = vmul.f32 %v468, %v669
      %v702 = vmul.f32 %v471, %v670
      %v703 = vmul.f32 %v474, %v671
      %v704 = vmul.f32 %v477, %v672
      %v705 = vmul.f32 %v480, %v673
      %v706 = vmul.f32 %v483, %v674
      %v707 = vmul.f32 %v486, %v675
      %v708 = vmul.f32 %v489, %v676
      %v709 = vmul.f32 %v492, %v677
      %v710 = vmul.f32 %v495, %v678
      %v711 = vmul.f32 %v498, %v679
      %v712 = vmul.f32 %v501, %v680
      %v713 = vmul.f32 %v504, %v681
      %v714 = vmul.f32 %v507, %v682
      %v715 = vmul.f32 %v510, %v683
      %v716 = vmul.f32 %v513, %v684
      %v717 = vmul.f32 %v516, %v685
      %v718 = vmul.f32 %v519, %v686
      %v719 = vmul.f32 %v522, %v687
      %v720 = vmul.f32 %v525, %v688
      %v721 = vmul.f32 %v528, %v689
      %vm722 = vcmask 15360
      %723 = vst.msk [vmem:[#allocation2] sm:$0xff] %vm722, 0.0
      %724 = vst.msk [vmem:[#allocation2 + $0x8] sm:$0xff] %vm722, 0.0
      %725 = vst.msk [vmem:[#allocation2 + $0x10] sm:$0xff] %vm722, 0.0
      %726 = vst.msk [vmem:[#allocation2 + $0x18] sm:$0xff] %vm722, 0.0
      %727 = vst.msk [vmem:[#allocation2 + $0x20] sm:$0xff] %vm722, 0.0
      %728 = vst.msk [vmem:[#allocation2 + $0x28] sm:$0xff] %vm722, 0.0
      %729 = vst.msk [vmem:[#allocation2 + $0x30] sm:$0xff] %vm722, 0.0
      %730 = vst.msk [vmem:[#allocation2 + $0x38] sm:$0xff] %vm722, 0.0
      %731 = vst.msk [vmem:[#allocation2 + $0x40] sm:$0xff] %vm722, 0.0
      %732 = vst.msk [vmem:[#allocation2 + $0x48] sm:$0xff] %vm722, 0.0
      %733 = vst.msk [vmem:[#allocation2 + $0x50] sm:$0xff] %vm722, 0.0
      %734 = vst.msk [vmem:[#allocation2 + $0x58] sm:$0xff] %vm722, 0.0
      %735 = vst.msk [vmem:[#allocation2 + $0x60] sm:$0xff] %vm722, 0.0
      %736 = vst.msk [vmem:[#allocation2 + $0x68] sm:$0xff] %vm722, 0.0
      %737 = vst.msk [vmem:[#allocation2 + $0x70] sm:$0xff] %vm722, 0.0
      %738 = vst.msk [vmem:[#allocation2 + $0x78] sm:$0xff] %vm722, 0.0
      %739 = vst.msk [vmem:[#allocation2 + $0x80] sm:$0xff] %vm722, 0.0
      %740 = vst.msk [vmem:[#allocation2 + $0x88] sm:$0xff] %vm722, 0.0
      %741 = vst.msk [vmem:[#allocation2 + $0x90] sm:$0xff] %vm722, 0.0
      %742 = vst.msk [vmem:[#allocation2 + $0x98] sm:$0xff] %vm722, 0.0
      %743 = vst.msk [vmem:[#allocation2 + $0xa0] sm:$0xff] %vm722, 0.0
      %744 = vst.msk [vmem:[#allocation2 + $0xa8] sm:$0xff] %vm722, 0.0
      %745 = vst.msk [vmem:[#allocation2 + $0xb0] sm:$0xff] %vm722, 0.0
      %746 = vst.msk [vmem:[#allocation2 + $0xb8] sm:$0xff] %vm722, 0.0
      %747 = vst.msk [vmem:[#allocation2 + $0xc0] sm:$0xff] %vm722, 0.0
      %748 = vst.msk [vmem:[#allocation2 + $0xc8] sm:$0xff] %vm722, 0.0
      %749 = vst.msk [vmem:[#allocation2 + $0xd0] sm:$0xff] %vm722, 0.0
      %750 = vst.msk [vmem:[#allocation2 + $0xd8] sm:$0xff] %vm722, 0.0
      %751 = vst.msk [vmem:[#allocation2 + $0xe0] sm:$0xff] %vm722, 0.0
      %752 = vst.msk [vmem:[#allocation2 + $0xe8] sm:$0xff] %vm722, 0.0
      %753 = vst.msk [vmem:[#allocation2 + $0xf0] sm:$0xff] %vm722, 0.0
      %754 = vst.msk [vmem:[#allocation2 + $0xf8] sm:$0xff] %vm722, 0.0
      %755 = vst.msk [vmem:[#allocation2 + $0x100] sm:$0xff] %vm722, 0.0
      %756 = vst.msk [vmem:[#allocation2 + $0x108] sm:$0xff] %vm722, 0.0
      %757 = vst.msk [vmem:[#allocation2 + $0x110] sm:$0xff] %vm722, 0.0
      %758 = vst.msk [vmem:[#allocation2 + $0x118] sm:$0xff] %vm722, 0.0
      %759 = vst.msk [vmem:[#allocation2 + $0x120] sm:$0xff] %vm722, 0.0
      %760 = vst.msk [vmem:[#allocation2 + $0x128] sm:$0xff] %vm722, 0.0
      %761 = vst.msk [vmem:[#allocation2 + $0x18] sm:$0xff] %vm722, %v690
      %762 = vst.msk [vmem:[#allocation2 + $0x20] sm:$0xff] %vm722, %v691
      %763 = vst.msk [vmem:[#allocation2 + $0x28] sm:$0xff] %vm722, %v692
      %764 = vst.msk [vmem:[#allocation2 + $0x30] sm:$0xff] %vm722, %v693
      %765 = vst.msk [vmem:[#allocation2 + $0x38] sm:$0xff] %vm722, %v694
      %766 = vst.msk [vmem:[#allocation2 + $0x40] sm:$0xff] %vm722, %v695
      %767 = vst.msk [vmem:[#allocation2 + $0x48] sm:$0xff] %vm722, %v696
      %768 = vst.msk [vmem:[#allocation2 + $0x50] sm:$0xff] %vm722, %v697
      %769 = vst.msk [vmem:[#allocation2 + $0x58] sm:$0xff] %vm722, %v698
      %770 = vst.msk [vmem:[#allocation2 + $0x60] sm:$0xff] %vm722, %v699
      %771 = vst.msk [vmem:[#allocation2 + $0x68] sm:$0xff] %vm722, %v700
      %772 = vst.msk [vmem:[#allocation2 + $0x70] sm:$0xff] %vm722, %v701
      %773 = vst.msk [vmem:[#allocation2 + $0x78] sm:$0xff] %vm722, %v702
      %774 = vst.msk [vmem:[#allocation2 + $0x80] sm:$0xff] %vm722, %v703
      %775 = vst.msk [vmem:[#allocation2 + $0x88] sm:$0xff] %vm722, %v704
      %776 = vst.msk [vmem:[#allocation2 + $0x90] sm:$0xff] %vm722, %v705
      %777 = vst.msk [vmem:[#allocation2 + $0x98] sm:$0xff] %vm722, %v706
      %778 = vst.msk [vmem:[#allocation2 + $0xa0] sm:$0xff] %vm722, %v707
      %779 = vst.msk [vmem:[#allocation2 + $0xa8] sm:$0xff] %vm722, %v708
      %780 = vst.msk [vmem:[#allocation2 + $0xb0] sm:$0xff] %vm722, %v709
      %781 = vst.msk [vmem:[#allocation2 + $0xb8] sm:$0xff] %vm722, %v710
      %782 = vst.msk [vmem:[#allocation2 + $0xc0] sm:$0xff] %vm722, %v711
      %783 = vst.msk [vmem:[#allocation2 + $0xc8] sm:$0xff] %vm722, %v712
      %784 = vst.msk [vmem:[#allocation2 + $0xd0] sm:$0xff] %vm722, %v713
      %785 = vst.msk [vmem:[#allocation2 + $0xd8] sm:$0xff] %vm722, %v714
      %786 = vst.msk [vmem:[#allocation2 + $0xe0] sm:$0xff] %vm722, %v715
      %787 = vst.msk [vmem:[#allocation2 + $0xe8] sm:$0xff] %vm722, %v716
      %788 = vst.msk [vmem:[#allocation2 + $0xf0] sm:$0xff] %vm722, %v717
      %789 = vst.msk [vmem:[#allocation2 + $0xf8] sm:$0xff] %vm722, %v718
      %790 = vst.msk [vmem:[#allocation2 + $0x100] sm:$0xff] %vm722, %v719
      %791 = vst.msk [vmem:[#allocation2 + $0x108] sm:$0xff] %vm722, %v720
      %792 = vst.msk [vmem:[#allocation2 + $0x110] sm:$0xff] %vm722, %v721
      %v793 = vld [vmem:[#allocation2 + $0x7] sm:$0xff]
      %v794 = vld [vmem:[#allocation2 + $0xf] sm:$0xff]
      %v795 = vld [vmem:[#allocation2 + $0x17] sm:$0xff]
      %v796 = vld [vmem:[#allocation2 + $0x1f] sm:$0xff]
      %v797 = vld [vmem:[#allocation2 + $0x27] sm:$0xff]
      %v798 = vld [vmem:[#allocation2 + $0x2f] sm:$0xff]
      %v799 = vld [vmem:[#allocation2 + $0x37] sm:$0xff]
      %v800 = vld [vmem:[#allocation2 + $0x3f] sm:$0xff]
      %v801 = vld [vmem:[#allocation2 + $0x47] sm:$0xff]
      %v802 = vld [vmem:[#allocation2 + $0x4f] sm:$0xff]
      %v803 = vld [vmem:[#allocation2 + $0x57] sm:$0xff]
      %v804 = vld [vmem:[#allocation2 + $0x5f] sm:$0xff]
      %v805 = vld [vmem:[#allocation2 + $0x67] sm:$0xff]
      %v806 = vld [vmem:[#allocation2 + $0x6f] sm:$0xff]
      %v807 = vld [vmem:[#allocation2 + $0x77] sm:$0xff]
      %v808 = vld [vmem:[#allocation2 + $0x7f] sm:$0xff]
      %v809 = vld [vmem:[#allocation2 + $0x87] sm:$0xff]
      %v810 = vld [vmem:[#allocation2 + $0x8f] sm:$0xff]
      %v811 = vld [vmem:[#allocation2 + $0x97] sm:$0xff]
      %v812 = vld [vmem:[#allocation2 + $0x9f] sm:$0xff]
      %v813 = vld [vmem:[#allocation2 + $0xa7] sm:$0xff]
      %v814 = vld [vmem:[#allocation2 + $0xaf] sm:$0xff]
      %v815 = vld [vmem:[#allocation2 + $0xb7] sm:$0xff]
      %v816 = vld [vmem:[#allocation2 + $0xbf] sm:$0xff]
      %v817 = vld [vmem:[#allocation2 + $0xc7] sm:$0xff]
      %v818 = vld [vmem:[#allocation2 + $0xcf] sm:$0xff]
      %v819 = vld [vmem:[#allocation2 + $0xd7] sm:$0xff]
      %v820 = vld [vmem:[#allocation2 + $0xdf] sm:$0xff]
      %v821 = vld [vmem:[#allocation2 + $0xe7] sm:$0xff]
      %v822 = vld [vmem:[#allocation2 + $0xef] sm:$0xff]
      %v823 = vld [vmem:[#allocation2 + $0xf7] sm:$0xff]
      %v824 = vld [vmem:[#allocation2 + $0xff] sm:$0xff]
      %v825 = vld [vmem:[%s5] sm:$0xff]
      %v826 = vld [vmem:[%s5 + $0x8] sm:$0xff]
      %v827 = vld [vmem:[%s5 + $0x10] sm:$0xff]
      %v828 = vld [vmem:[%s5 + $0x18] sm:$0xff]
      %v829 = vld [vmem:[%s5 + $0x20] sm:$0xff]
      %v830 = vld [vmem:[%s5 + $0x28] sm:$0xff]
      %v831 = vld [vmem:[%s5 + $0x30] sm:$0xff]
      %v832 = vld [vmem:[%s5 + $0x38] sm:$0xff]
      %v833 = vld [vmem:[%s5 + $0x40] sm:$0xff]
      %v834 = vld [vmem:[%s5 + $0x48] sm:$0xff]
      %v835 = vld [vmem:[%s5 + $0x50] sm:$0xff]
      %v836 = vld [vmem:[%s5 + $0x58] sm:$0xff]
      %v837 = vld [vmem:[%s5 + $0x60] sm:$0xff]
      %v838 = vld [vmem:[%s5 + $0x68] sm:$0xff]
      %v839 = vld [vmem:[%s5 + $0x70] sm:$0xff]
      %v840 = vld [vmem:[%s5 + $0x78] sm:$0xff]
      %v841 = vld [vmem:[%s5 + $0x80] sm:$0xff]
      %v842 = vld [vmem:[%s5 + $0x88] sm:$0xff]
      %v843 = vld [vmem:[%s5 + $0x90] sm:$0xff]
      %v844 = vld [vmem:[%s5 + $0x98] sm:$0xff]
      %v845 = vld [vmem:[%s5 + $0xa0] sm:$0xff]
      %v846 = vld [vmem:[%s5 + $0xa8] sm:$0xff]
      %v847 = vld [vmem:[%s5 + $0xb0] sm:$0xff]
      %v848 = vld [vmem:[%s5 + $0xb8] sm:$0xff]
      %v849 = vld [vmem:[%s5 + $0xc0] sm:$0xff]
      %v850 = vld [vmem:[%s5 + $0xc8] sm:$0xff]
      %v851 = vld [vmem:[%s5 + $0xd0] sm:$0xff]
      %v852 = vld [vmem:[%s5 + $0xd8] sm:$0xff]
      %v853 = vld [vmem:[%s5 + $0xe0] sm:$0xff]
      %v854 = vld [vmem:[%s5 + $0xe8] sm:$0xff]
      %v855 = vld [vmem:[%s5 + $0xf0] sm:$0xff]
      %v856 = vld [vmem:[%s5 + $0xf8] sm:$0xff]
      %858 = vset.pattern.permute.xlu0 0
      %859 = vperm.xlu0 %858, %v825
      %v860 = vpop.permute.xlu0 %859
      %863 = vset.pattern.permute.xlu0 0
      %864 = vperm.xlu0 %863, %v826
      %v865 = vpop.permute.xlu0 %864
      %868 = vset.pattern.permute.xlu0 0
      %869 = vperm.xlu0 %868, %v827
      %v870 = vpop.permute.xlu0 %869
      %873 = vset.pattern.permute.xlu0 0
      %874 = vperm.xlu0 %873, %v828
      %v875 = vpop.permute.xlu0 %874
      %878 = vset.pattern.permute.xlu0 0
      %879 = vperm.xlu0 %878, %v829
      %v880 = vpop.permute.xlu0 %879
      %883 = vset.pattern.permute.xlu0 0
      %884 = vperm.xlu0 %883, %v830
      %v885 = vpop.permute.xlu0 %884
      %888 = vset.pattern.permute.xlu0 0
      %889 = vperm.xlu0 %888, %v831
      %v890 = vpop.permute.xlu0 %889
      %893 = vset.pattern.permute.xlu0 0
      %894 = vperm.xlu0 %893, %v832
      %v895 = vpop.permute.xlu0 %894
      %898 = vset.pattern.permute.xlu0 0
      %899 = vperm.xlu0 %898, %v833
      %v900 = vpop.permute.xlu0 %899
      %903 = vset.pattern.permute.xlu0 0
      %904 = vperm.xlu0 %903, %v834
      %v905 = vpop.permute.xlu0 %904
      %908 = vset.pattern.permute.xlu0 0
      %909 = vperm.xlu0 %908, %v835
      %v910 = vpop.permute.xlu0 %909
      %913 = vset.pattern.permute.xlu0 0
      %914 = vperm.xlu0 %913, %v836
      %v915 = vpop.permute.xlu0 %914
      %918 = vset.pattern.permute.xlu0 0
      %919 = vperm.xlu0 %918, %v837
      %v920 = vpop.permute.xlu0 %919
      %923 = vset.pattern.permute.xlu0 0
      %924 = vperm.xlu0 %923, %v838
      %v925 = vpop.permute.xlu0 %924
      %928 = vset.pattern.permute.xlu0 0
      %929 = vperm.xlu0 %928, %v839
      %v930 = vpop.permute.xlu0 %929
      %933 = vset.pattern.permute.xlu0 0
      %934 = vperm.xlu0 %933, %v840
      %v935 = vpop.permute.xlu0 %934
      %938 = vset.pattern.permute.xlu0 0
      %939 = vperm.xlu0 %938, %v841
      %v940 = vpop.permute.xlu0 %939
      %943 = vset.pattern.permute.xlu0 0
      %944 = vperm.xlu0 %943, %v842
      %v945 = vpop.permute.xlu0 %944
      %948 = vset.pattern.permute.xlu0 0
      %949 = vperm.xlu0 %948, %v843
      %v950 = vpop.permute.xlu0 %949
      %953 = vset.pattern.permute.xlu0 0
      %954 = vperm.xlu0 %953, %v844
      %v955 = vpop.permute.xlu0 %954
      %958 = vset.pattern.permute.xlu0 0
      %959 = vperm.xlu0 %958, %v845
      %v960 = vpop.permute.xlu0 %959
      %963 = vset.pattern.permute.xlu0 0
      %964 = vperm.xlu0 %963, %v846
      %v965 = vpop.permute.xlu0 %964
      %968 = vset.pattern.permute.xlu0 0
      %969 = vperm.xlu0 %968, %v847
      %v970 = vpop.permute.xlu0 %969
      %973 = vset.pattern.permute.xlu0 0
      %974 = vperm.xlu0 %973, %v848
      %v975 = vpop.permute.xlu0 %974
      %978 = vset.pattern.permute.xlu0 0
      %979 = vperm.xlu0 %978, %v849
      %v980 = vpop.permute.xlu0 %979
      %983 = vset.pattern.permute.xlu0 0
      %984 = vperm.xlu0 %983, %v850
      %v985 = vpop.permute.xlu0 %984
      %988 = vset.pattern.permute.xlu0 0
      %989 = vperm.xlu0 %988, %v851
      %v990 = vpop.permute.xlu0 %989
      %993 = vset.pattern.permute.xlu0 0
      %994 = vperm.xlu0 %993, %v852
      %v995 = vpop.permute.xlu0 %994
      %998 = vset.pattern.permute.xlu0 0
      %999 = vperm.xlu0 %998, %v853
      %v1000 = vpop.permute.xlu0 %999
      %1003 = vset.pattern.permute.xlu0 0
      %1004 = vperm.xlu0 %1003, %v854
      %v1005 = vpop.permute.xlu0 %1004
      %1008 = vset.pattern.permute.xlu0 0
      %1009 = vperm.xlu0 %1008, %v855
      %v1010 = vpop.permute.xlu0 %1009
      %1013 = vset.pattern.permute.xlu0 0
      %1014 = vperm.xlu0 %1013, %v856
      %v1015 = vpop.permute.xlu0 %1014
      %v1017 = vmul.f32 %v793, %v860
      %v1018 = vmul.f32 %v794, %v865
      %v1019 = vmul.f32 %v795, %v870
      %v1020 = vmul.f32 %v796, %v875
      %v1021 = vmul.f32 %v797, %v880
      %v1022 = vmul.f32 %v798, %v885
      %v1023 = vmul.f32 %v799, %v890
      %v1024 = vmul.f32 %v800, %v895
      %v1025 = vmul.f32 %v801, %v900
      %v1026 = vmul.f32 %v802, %v905
      %v1027 = vmul.f32 %v803, %v910
      %v1028 = vmul.f32 %v804, %v915
      %v1029 = vmul.f32 %v805, %v920
      %v1030 = vmul.f32 %v806, %v925
      %v1031 = vmul.f32 %v807, %v930
      %v1032 = vmul.f32 %v808, %v935
      %v1033 = vmul.f32 %v809, %v940
      %v1034 = vmul.f32 %v810, %v945
      %v1035 = vmul.f32 %v811, %v950
      %v1036 = vmul.f32 %v812, %v955
      %v1037 = vmul.f32 %v813, %v960
      %v1038 = vmul.f32 %v814, %v965
      %v1039 = vmul.f32 %v815, %v970
      %v1040 = vmul.f32 %v816, %v975
      %v1041 = vmul.f32 %v817, %v980
      %v1042 = vmul.f32 %v818, %v985
      %v1043 = vmul.f32 %v819, %v990
      %v1044 = vmul.f32 %v820, %v995
      %v1045 = vmul.f32 %v821, %v1000
      %v1046 = vmul.f32 %v822, %v1005
      %v1047 = vmul.f32 %v823, %v1010
      %v1048 = vmul.f32 %v824, %v1015
      %v1049 = vld [vmem:[#allocation2 + $0x8] sm:$0xff]
      %v1050 = vld [vmem:[#allocation2 + $0x10] sm:$0xff]
      %v1051 = vld [vmem:[#allocation2 + $0x18] sm:$0xff]
      %v1052 = vld [vmem:[#allocation2 + $0x20] sm:$0xff]
      %v1053 = vld [vmem:[#allocation2 + $0x28] sm:$0xff]
      %v1054 = vld [vmem:[#allocation2 + $0x30] sm:$0xff]
      %v1055 = vld [vmem:[#allocation2 + $0x38] sm:$0xff]
      %v1056 = vld [vmem:[#allocation2 + $0x40] sm:$0xff]
      %v1057 = vld [vmem:[#allocation2 + $0x48] sm:$0xff]
      %v1058 = vld [vmem:[#allocation2 + $0x50] sm:$0xff]
      %v1059 = vld [vmem:[#allocation2 + $0x58] sm:$0xff]
      %v1060 = vld [vmem:[#allocation2 + $0x60] sm:$0xff]
      %v1061 = vld [vmem:[#allocation2 + $0x68] sm:$0xff]
      %v1062 = vld [vmem:[#allocation2 + $0x70] sm:$0xff]
      %v1063 = vld [vmem:[#allocation2 + $0x78] sm:$0xff]
      %v1064 = vld [vmem:[#allocation2 + $0x80] sm:$0xff]
      %v1065 = vld [vmem:[#allocation2 + $0x88] sm:$0xff]
      %v1066 = vld [vmem:[#allocation2 + $0x90] sm:$0xff]
      %v1067 = vld [vmem:[#allocation2 + $0x98] sm:$0xff]
      %v1068 = vld [vmem:[#allocation2 + $0xa0] sm:$0xff]
      %v1069 = vld [vmem:[#allocation2 + $0xa8] sm:$0xff]
      %v1070 = vld [vmem:[#allocation2 + $0xb0] sm:$0xff]
      %v1071 = vld [vmem:[#allocation2 + $0xb8] sm:$0xff]
      %v1072 = vld [vmem:[#allocation2 + $0xc0] sm:$0xff]
      %v1073 = vld [vmem:[#allocation2 + $0xc8] sm:$0xff]
      %v1074 = vld [vmem:[#allocation2 + $0xd0] sm:$0xff]
      %v1075 = vld [vmem:[#allocation2 + $0xd8] sm:$0xff]
      %v1076 = vld [vmem:[#allocation2 + $0xe0] sm:$0xff]
      %v1077 = vld [vmem:[#allocation2 + $0xe8] sm:$0xff]
      %v1078 = vld [vmem:[#allocation2 + $0xf0] sm:$0xff]
      %v1079 = vld [vmem:[#allocation2 + $0xf8] sm:$0xff]
      %v1080 = vld [vmem:[#allocation2 + $0x100] sm:$0xff]
      %v1081 = vld [vmem:[#allocation2 + $0x9] sm:$0xff]
      %v1082 = vld [vmem:[#allocation2 + $0x11] sm:$0xff]
      %v1083 = vld [vmem:[#allocation2 + $0x19] sm:$0xff]
      %v1084 = vld [vmem:[#allocation2 + $0x21] sm:$0xff]
      %v1085 = vld [vmem:[#allocation2 + $0x29] sm:$0xff]
      %v1086 = vld [vmem:[#allocation2 + $0x31] sm:$0xff]
      %v1087 = vld [vmem:[#allocation2 + $0x39] sm:$0xff]
      %v1088 = vld [vmem:[#allocation2 + $0x41] sm:$0xff]
      %v1089 = vld [vmem:[#allocation2 + $0x49] sm:$0xff]
      %v1090 = vld [vmem:[#allocation2 + $0x51] sm:$0xff]
      %v1091 = vld [vmem:[#allocation2 + $0x59] sm:$0xff]
      %v1092 = vld [vmem:[#allocation2 + $0x61] sm:$0xff]
      %v1093 = vld [vmem:[#allocation2 + $0x69] sm:$0xff]
      %v1094 = vld [vmem:[#allocation2 + $0x71] sm:$0xff]
      %v1095 = vld [vmem:[#allocation2 + $0x79] sm:$0xff]
      %v1096 = vld [vmem:[#allocation2 + $0x81] sm:$0xff]
      %v1097 = vld [vmem:[#allocation2 + $0x89] sm:$0xff]
      %v1098 = vld [vmem:[#allocation2 + $0x91] sm:$0xff]
      %v1099 = vld [vmem:[#allocation2 + $0x99] sm:$0xff]
      %v1100 = vld [vmem:[#allocation2 + $0xa1] sm:$0xff]
      %v1101 = vld [vmem:[#allocation2 + $0xa9] sm:$0xff]
      %v1102 = vld [vmem:[#allocation2 + $0xb1] sm:$0xff]
      %v1103 = vld [vmem:[#allocation2 + $0xb9] sm:$0xff]
      %v1104 = vld [vmem:[#allocation2 + $0xc1] sm:$0xff]
      %v1105 = vld [vmem:[#allocation2 + $0xc9] sm:$0xff]
      %v1106 = vld [vmem:[#allocation2 + $0xd1] sm:$0xff]
      %v1107 = vld [vmem:[#allocation2 + $0xd9] sm:$0xff]
      %v1108 = vld [vmem:[#allocation2 + $0xe1] sm:$0xff]
      %v1109 = vld [vmem:[#allocation2 + $0xe9] sm:$0xff]
      %v1110 = vld [vmem:[#allocation2 + $0xf1] sm:$0xff]
      %v1111 = vld [vmem:[#allocation2 + $0xf9] sm:$0xff]
      %v1112 = vld [vmem:[#allocation2 + $0x101] sm:$0xff]
      %v1113 = vld [vmem:[%s6] sm:$0xff]
      %v1114 = vld [vmem:[%s6 + $0x8] sm:$0xff]
      %v1115 = vld [vmem:[%s6 + $0x10] sm:$0xff]
      %v1116 = vld [vmem:[%s6 + $0x18] sm:$0xff]
      %v1117 = vld [vmem:[%s6 + $0x20] sm:$0xff]
      %v1118 = vld [vmem:[%s6 + $0x28] sm:$0xff]
      %v1119 = vld [vmem:[%s6 + $0x30] sm:$0xff]
      %v1120 = vld [vmem:[%s6 + $0x38] sm:$0xff]
      %v1121 = vld [vmem:[%s6 + $0x40] sm:$0xff]
      %v1122 = vld [vmem:[%s6 + $0x48] sm:$0xff]
      %v1123 = vld [vmem:[%s6 + $0x50] sm:$0xff]
      %v1124 = vld [vmem:[%s6 + $0x58] sm:$0xff]
      %v1125 = vld [vmem:[%s6 + $0x60] sm:$0xff]
      %v1126 = vld [vmem:[%s6 + $0x68] sm:$0xff]
      %v1127 = vld [vmem:[%s6 + $0x70] sm:$0xff]
      %v1128 = vld [vmem:[%s6 + $0x78] sm:$0xff]
      %v1129 = vld [vmem:[%s6 + $0x80] sm:$0xff]
      %v1130 = vld [vmem:[%s6 + $0x88] sm:$0xff]
      %v1131 = vld [vmem:[%s6 + $0x90] sm:$0xff]
      %v1132 = vld [vmem:[%s6 + $0x98] sm:$0xff]
      %v1133 = vld [vmem:[%s6 + $0xa0] sm:$0xff]
      %v1134 = vld [vmem:[%s6 + $0xa8] sm:$0xff]
      %v1135 = vld [vmem:[%s6 + $0xb0] sm:$0xff]
      %v1136 = vld [vmem:[%s6 + $0xb8] sm:$0xff]
      %v1137 = vld [vmem:[%s6 + $0xc0] sm:$0xff]
      %v1138 = vld [vmem:[%s6 + $0xc8] sm:$0xff]
      %v1139 = vld [vmem:[%s6 + $0xd0] sm:$0xff]
      %v1140 = vld [vmem:[%s6 + $0xd8] sm:$0xff]
      %v1141 = vld [vmem:[%s6 + $0xe0] sm:$0xff]
      %v1142 = vld [vmem:[%s6 + $0xe8] sm:$0xff]
      %v1143 = vld [vmem:[%s6 + $0xf0] sm:$0xff]
      %v1144 = vld [vmem:[%s6 + $0xf8] sm:$0xff]
      %1146 = vset.pattern.permute.xlu0 0
      %1147 = vperm.xlu0 %1146, %v1113
      %v1148 = vpop.permute.xlu0 %1147
      %1151 = vset.pattern.permute.xlu0 0
      %1152 = vperm.xlu0 %1151, %v1114
      %v1153 = vpop.permute.xlu0 %1152
      %1156 = vset.pattern.permute.xlu0 0
      %1157 = vperm.xlu0 %1156, %v1115
      %v1158 = vpop.permute.xlu0 %1157
      %1161 = vset.pattern.permute.xlu0 0
      %1162 = vperm.xlu0 %1161, %v1116
      %v1163 = vpop.permute.xlu0 %1162
      %1166 = vset.pattern.permute.xlu0 0
      %1167 = vperm.xlu0 %1166, %v1117
      %v1168 = vpop.permute.xlu0 %1167
      %1171 = vset.pattern.permute.xlu0 0
      %1172 = vperm.xlu0 %1171, %v1118
      %v1173 = vpop.permute.xlu0 %1172
      %1176 = vset.pattern.permute.xlu0 0
      %1177 = vperm.xlu0 %1176, %v1119
      %v1178 = vpop.permute.xlu0 %1177
      %1181 = vset.pattern.permute.xlu0 0
      %1182 = vperm.xlu0 %1181, %v1120
      %v1183 = vpop.permute.xlu0 %1182
      %1186 = vset.pattern.permute.xlu0 0
      %1187 = vperm.xlu0 %1186, %v1121
      %v1188 = vpop.permute.xlu0 %1187
      %1191 = vset.pattern.permute.xlu0 0
      %1192 = vperm.xlu0 %1191, %v1122
      %v1193 = vpop.permute.xlu0 %1192
      %1196 = vset.pattern.permute.xlu0 0
      %1197 = vperm.xlu0 %1196, %v1123
      %v1198 = vpop.permute.xlu0 %1197
      %1201 = vset.pattern.permute.xlu0 0
      %1202 = vperm.xlu0 %1201, %v1124
      %v1203 = vpop.permute.xlu0 %1202
      %1206 = vset.pattern.permute.xlu0 0
      %1207 = vperm.xlu0 %1206, %v1125
      %v1208 = vpop.permute.xlu0 %1207
      %1211 = vset.pattern.permute.xlu0 0
      %1212 = vperm.xlu0 %1211, %v1126
      %v1213 = vpop.permute.xlu0 %1212
      %1216 = vset.pattern.permute.xlu0 0
      %1217 = vperm.xlu0 %1216, %v1127
      %v1218 = vpop.permute.xlu0 %1217
      %1221 = vset.pattern.permute.xlu0 0
      %1222 = vperm.xlu0 %1221, %v1128
      %v1223 = vpop.permute.xlu0 %1222
      %1226 = vset.pattern.permute.xlu0 0
      %1227 = vperm.xlu0 %1226, %v1129
      %v1228 = vpop.permute.xlu0 %1227
      %1231 = vset.pattern.permute.xlu0 0
      %1232 = vperm.xlu0 %1231, %v1130
      %v1233 = vpop.permute.xlu0 %1232
      %1236 = vset.pattern.permute.xlu0 0
      %1237 = vperm.xlu0 %1236, %v1131
      %v1238 = vpop.permute.xlu0 %1237
      %1241 = vset.pattern.permute.xlu0 0
      %1242 = vperm.xlu0 %1241, %v1132
      %v1243 = vpop.permute.xlu0 %1242
      %1246 = vset.pattern.permute.xlu0 0
      %1247 = vperm.xlu0 %1246, %v1133
      %v1248 = vpop.permute.xlu0 %1247
      %1251 = vset.pattern.permute.xlu0 0
      %1252 = vperm.xlu0 %1251, %v1134
      %v1253 = vpop.permute.xlu0 %1252
      %1256 = vset.pattern.permute.xlu0 0
      %1257 = vperm.xlu0 %1256, %v1135
      %v1258 = vpop.permute.xlu0 %1257
      %1261 = vset.pattern.permute.xlu0 0
      %1262 = vperm.xlu0 %1261, %v1136
      %v1263 = vpop.permute.xlu0 %1262
      %1266 = vset.pattern.permute.xlu0 0
      %1267 = vperm.xlu0 %1266, %v1137
      %v1268 = vpop.permute.xlu0 %1267
      %1271 = vset.pattern.permute.xlu0 0
      %1272 = vperm.xlu0 %1271, %v1138
      %v1273 = vpop.permute.xlu0 %1272
      %1276 = vset.pattern.permute.xlu0 0
      %1277 = vperm.xlu0 %1276, %v1139
      %v1278 = vpop.permute.xlu0 %1277
      %1281 = vset.pattern.permute.xlu0 0
      %1282 = vperm.xlu0 %1281, %v1140
      %v1283 = vpop.permute.xlu0 %1282
      %1286 = vset.pattern.permute.xlu0 0
      %1287 = vperm.xlu0 %1286, %v1141
      %v1288 = vpop.permute.xlu0 %1287
      %1291 = vset.pattern.permute.xlu0 0
      %1292 = vperm.xlu0 %1291, %v1142
      %v1293 = vpop.permute.xlu0 %1292
      %1296 = vset.pattern.permute.xlu0 0
      %1297 = vperm.xlu0 %1296, %v1143
      %v1298 = vpop.permute.xlu0 %1297
      %1301 = vset.pattern.permute.xlu0 0
      %1302 = vperm.xlu0 %1301, %v1144
      %v1303 = vpop.permute.xlu0 %1302
      %v1305 = vmul.f32 %v1081, %v1148
      %v1306 = vmul.f32 %v1082, %v1153
      %v1307 = vmul.f32 %v1083, %v1158
      %v1308 = vmul.f32 %v1084, %v1163
      %v1309 = vmul.f32 %v1085, %v1168
      %v1310 = vmul.f32 %v1086, %v1173
      %v1311 = vmul.f32 %v1087, %v1178
      %v1312 = vmul.f32 %v1088, %v1183
      %v1313 = vmul.f32 %v1089, %v1188
      %v1314 = vmul.f32 %v1090, %v1193
      %v1315 = vmul.f32 %v1091, %v1198
      %v1316 = vmul.f32 %v1092, %v1203
      %v1317 = vmul.f32 %v1093, %v1208
      %v1318 = vmul.f32 %v1094, %v1213
      %v1319 = vmul.f32 %v1095, %v1218
      %v1320 = vmul.f32 %v1096, %v1223
      %v1321 = vmul.f32 %v1097, %v1228
      %v1322 = vmul.f32 %v1098, %v1233
      %v1323 = vmul.f32 %v1099, %v1238
      %v1324 = vmul.f32 %v1100, %v1243
      %v1325 = vmul.f32 %v1101, %v1248
      %v1326 = vmul.f32 %v1102, %v1253
      %v1327 = vmul.f32 %v1103, %v1258
      %v1328 = vmul.f32 %v1104, %v1263
      %v1329 = vmul.f32 %v1105, %v1268
      %v1330 = vmul.f32 %v1106, %v1273
      %v1331 = vmul.f32 %v1107, %v1278
      %v1332 = vmul.f32 %v1108, %v1283
      %v1333 = vmul.f32 %v1109, %v1288
      %v1334 = vmul.f32 %v1110, %v1293
      %v1335 = vmul.f32 %v1111, %v1298
      %v1336 = vmul.f32 %v1112, %v1303
      %v1337 = vld [vmem:[#allocation2 + $0x17] sm:$0xff]
      %v1338 = vld [vmem:[#allocation2 + $0x1f] sm:$0xff]
      %v1339 = vld [vmem:[#allocation2 + $0x27] sm:$0xff]
      %v1340 = vld [vmem:[#allocation2 + $0x2f] sm:$0xff]
      %v1341 = vld [vmem:[#allocation2 + $0x37] sm:$0xff]
      %v1342 = vld [vmem:[#allocation2 + $0x3f] sm:$0xff]
      %v1343 = vld [vmem:[#allocation2 + $0x47] sm:$0xff]
      %v1344 = vld [vmem:[#allocation2 + $0x4f] sm:$0xff]
      %v1345 = vld [vmem:[#allocation2 + $0x57] sm:$0xff]
      %v1346 = vld [vmem:[#allocation2 + $0x5f] sm:$0xff]
      %v1347 = vld [vmem:[#allocation2 + $0x67] sm:$0xff]
      %v1348 = vld [vmem:[#allocation2 + $0x6f] sm:$0xff]
      %v1349 = vld [vmem:[#allocation2 + $0x77] sm:$0xff]
      %v1350 = vld [vmem:[#allocation2 + $0x7f] sm:$0xff]
      %v1351 = vld [vmem:[#allocation2 + $0x87] sm:$0xff]
      %v1352 = vld [vmem:[#allocation2 + $0x8f] sm:$0xff]
      %v1353 = vld [vmem:[#allocation2 + $0x97] sm:$0xff]
      %v1354 = vld [vmem:[#allocation2 + $0x9f] sm:$0xff]
      %v1355 = vld [vmem:[#allocation2 + $0xa7] sm:$0xff]
      %v1356 = vld [vmem:[#allocation2 + $0xaf] sm:$0xff]
      %v1357 = vld [vmem:[#allocation2 + $0xb7] sm:$0xff]
      %v1358 = vld [vmem:[#allocation2 + $0xbf] sm:$0xff]
      %v1359 = vld [vmem:[#allocation2 + $0xc7] sm:$0xff]
      %v1360 = vld [vmem:[#allocation2 + $0xcf] sm:$0xff]
      %v1361 = vld [vmem:[#allocation2 + $0xd7] sm:$0xff]
      %v1362 = vld [vmem:[#allocation2 + $0xdf] sm:$0xff]
      %v1363 = vld [vmem:[#allocation2 + $0xe7] sm:$0xff]
      %v1364 = vld [vmem:[#allocation2 + $0xef] sm:$0xff]
      %v1365 = vld [vmem:[#allocation2 + $0xf7] sm:$0xff]
      %v1366 = vld [vmem:[#allocation2 + $0xff] sm:$0xff]
      %v1367 = vld [vmem:[#allocation2 + $0x107] sm:$0xff]
      %v1368 = vld [vmem:[#allocation2 + $0x10f] sm:$0xff]
      %v1369 = vmul.f32 %v1337, %v860
      %v1370 = vmul.f32 %v1338, %v865
      %v1371 = vmul.f32 %v1339, %v870
      %v1372 = vmul.f32 %v1340, %v875
      %v1373 = vmul.f32 %v1341, %v880
      %v1374 = vmul.f32 %v1342, %v885
      %v1375 = vmul.f32 %v1343, %v890
      %v1376 = vmul.f32 %v1344, %v895
      %v1377 = vmul.f32 %v1345, %v900
      %v1378 = vmul.f32 %v1346, %v905
      %v1379 = vmul.f32 %v1347, %v910
      %v1380 = vmul.f32 %v1348, %v915
      %v1381 = vmul.f32 %v1349, %v920
      %v1382 = vmul.f32 %v1350, %v925
      %v1383 = vmul.f32 %v1351, %v930
      %v1384 = vmul.f32 %v1352, %v935
      %v1385 = vmul.f32 %v1353, %v940
      %v1386 = vmul.f32 %v1354, %v945
      %v1387 = vmul.f32 %v1355, %v950
      %v1388 = vmul.f32 %v1356, %v955
      %v1389 = vmul.f32 %v1357, %v960
      %v1390 = vmul.f32 %v1358, %v965
      %v1391 = vmul.f32 %v1359, %v970
      %v1392 = vmul.f32 %v1360, %v975
      %v1393 = vmul.f32 %v1361, %v980
      %v1394 = vmul.f32 %v1362, %v985
      %v1395 = vmul.f32 %v1363, %v990
      %v1396 = vmul.f32 %v1364, %v995
      %v1397 = vmul.f32 %v1365, %v1000
      %v1398 = vmul.f32 %v1366, %v1005
      %v1399 = vmul.f32 %v1367, %v1010
      %v1400 = vmul.f32 %v1368, %v1015
      %v1401 = vld [vmem:[#allocation2 + $0x18] sm:$0xff]
      %v1402 = vld [vmem:[#allocation2 + $0x20] sm:$0xff]
      %v1403 = vld [vmem:[#allocation2 + $0x28] sm:$0xff]
      %v1404 = vld [vmem:[#allocation2 + $0x30] sm:$0xff]
      %v1405 = vld [vmem:[#allocation2 + $0x38] sm:$0xff]
      %v1406 = vld [vmem:[#allocation2 + $0x40] sm:$0xff]
      %v1407 = vld [vmem:[#allocation2 + $0x48] sm:$0xff]
      %v1408 = vld [vmem:[#allocation2 + $0x50] sm:$0xff]
      %v1409 = vld [vmem:[#allocation2 + $0x58] sm:$0xff]
      %v1410 = vld [vmem:[#allocation2 + $0x60] sm:$0xff]
      %v1411 = vld [vmem:[#allocation2 + $0x68] sm:$0xff]
      %v1412 = vld [vmem:[#allocation2 + $0x70] sm:$0xff]
      %v1413 = vld [vmem:[#allocation2 + $0x78] sm:$0xff]
      %v1414 = vld [vmem:[#allocation2 + $0x80] sm:$0xff]
      %v1415 = vld [vmem:[#allocation2 + $0x88] sm:$0xff]
      %v1416 = vld [vmem:[#allocation2 + $0x90] sm:$0xff]
      %v1417 = vld [vmem:[#allocation2 + $0x98] sm:$0xff]
      %v1418 = vld [vmem:[#allocation2 + $0xa0] sm:$0xff]
      %v1419 = vld [vmem:[#allocation2 + $0xa8] sm:$0xff]
      %v1420 = vld [vmem:[#allocation2 + $0xb0] sm:$0xff]
      %v1421 = vld [vmem:[#allocation2 + $0xb8] sm:$0xff]
      %v1422 = vld [vmem:[#allocation2 + $0xc0] sm:$0xff]
      %v1423 = vld [vmem:[#allocation2 + $0xc8] sm:$0xff]
      %v1424 = vld [vmem:[#allocation2 + $0xd0] sm:$0xff]
      %v1425 = vld [vmem:[#allocation2 + $0xd8] sm:$0xff]
      %v1426 = vld [vmem:[#allocation2 + $0xe0] sm:$0xff]
      %v1427 = vld [vmem:[#allocation2 + $0xe8] sm:$0xff]
      %v1428 = vld [vmem:[#allocation2 + $0xf0] sm:$0xff]
      %v1429 = vld [vmem:[#allocation2 + $0xf8] sm:$0xff]
      %v1430 = vld [vmem:[#allocation2 + $0x100] sm:$0xff]
      %v1431 = vld [vmem:[#allocation2 + $0x108] sm:$0xff]
      %v1432 = vld [vmem:[#allocation2 + $0x110] sm:$0xff]
      %v1433 = vld [vmem:[#allocation2 + $0x19] sm:$0xff]
      %v1434 = vld [vmem:[#allocation2 + $0x21] sm:$0xff]
      %v1435 = vld [vmem:[#allocation2 + $0x29] sm:$0xff]
      %v1436 = vld [vmem:[#allocation2 + $0x31] sm:$0xff]
      %v1437 = vld [vmem:[#allocation2 + $0x39] sm:$0xff]
      %v1438 = vld [vmem:[#allocation2 + $0x41] sm:$0xff]
      %v1439 = vld [vmem:[#allocation2 + $0x49] sm:$0xff]
      %v1440 = vld [vmem:[#allocation2 + $0x51] sm:$0xff]
      %v1441 = vld [vmem:[#allocation2 + $0x59] sm:$0xff]
      %v1442 = vld [vmem:[#allocation2 + $0x61] sm:$0xff]
      %v1443 = vld [vmem:[#allocation2 + $0x69] sm:$0xff]
      %v1444 = vld [vmem:[#allocation2 + $0x71] sm:$0xff]
      %v1445 = vld [vmem:[#allocation2 + $0x79] sm:$0xff]
      %v1446 = vld [vmem:[#allocation2 + $0x81] sm:$0xff]
      %v1447 = vld [vmem:[#allocation2 + $0x89] sm:$0xff]
      %v1448 = vld [vmem:[#allocation2 + $0x91] sm:$0xff]
      %v1449 = vld [vmem:[#allocation2 + $0x99] sm:$0xff]
      %v1450 = vld [vmem:[#allocation2 + $0xa1] sm:$0xff]
      %v1451 = vld [vmem:[#allocation2 + $0xa9] sm:$0xff]
      %v1452 = vld [vmem:[#allocation2 + $0xb1] sm:$0xff]
      %v1453 = vld [vmem:[#allocation2 + $0xb9] sm:$0xff]
      %v1454 = vld [vmem:[#allocation2 + $0xc1] sm:$0xff]
      %v1455 = vld [vmem:[#allocation2 + $0xc9] sm:$0xff]
      %v1456 = vld [vmem:[#allocation2 + $0xd1] sm:$0xff]
      %v1457 = vld [vmem:[#allocation2 + $0xd9] sm:$0xff]
      %v1458 = vld [vmem:[#allocation2 + $0xe1] sm:$0xff]
      %v1459 = vld [vmem:[#allocation2 + $0xe9] sm:$0xff]
      %v1460 = vld [vmem:[#allocation2 + $0xf1] sm:$0xff]
      %v1461 = vld [vmem:[#allocation2 + $0xf9] sm:$0xff]
      %v1462 = vld [vmem:[#allocation2 + $0x101] sm:$0xff]
      %v1463 = vld [vmem:[#allocation2 + $0x109] sm:$0xff]
      %v1464 = vld [vmem:[#allocation2 + $0x111] sm:$0xff]
      %v1465 = vmul.f32 %v1433, %v1148
      %v1466 = vmul.f32 %v1434, %v1153
      %v1467 = vmul.f32 %v1435, %v1158
      %v1468 = vmul.f32 %v1436, %v1163
      %v1469 = vmul.f32 %v1437, %v1168
      %v1470 = vmul.f32 %v1438, %v1173
      %v1471 = vmul.f32 %v1439, %v1178
      %v1472 = vmul.f32 %v1440, %v1183
      %v1473 = vmul.f32 %v1441, %v1188
      %v1474 = vmul.f32 %v1442, %v1193
      %v1475 = vmul.f32 %v1443, %v1198
      %v1476 = vmul.f32 %v1444, %v1203
      %v1477 = vmul.f32 %v1445, %v1208
      %v1478 = vmul.f32 %v1446, %v1213
      %v1479 = vmul.f32 %v1447, %v1218
      %v1480 = vmul.f32 %v1448, %v1223
      %v1481 = vmul.f32 %v1449, %v1228
      %v1482 = vmul.f32 %v1450, %v1233
      %v1483 = vmul.f32 %v1451, %v1238
      %v1484 = vmul.f32 %v1452, %v1243
      %v1485 = vmul.f32 %v1453, %v1248
      %v1486 = vmul.f32 %v1454, %v1253
      %v1487 = vmul.f32 %v1455, %v1258
      %v1488 = vmul.f32 %v1456, %v1263
      %v1489 = vmul.f32 %v1457, %v1268
      %v1490 = vmul.f32 %v1458, %v1273
      %v1491 = vmul.f32 %v1459, %v1278
      %v1492 = vmul.f32 %v1460, %v1283
      %v1493 = vmul.f32 %v1461, %v1288
      %v1494 = vmul.f32 %v1462, %v1293
      %v1495 = vmul.f32 %v1463, %v1298
      %v1496 = vmul.f32 %v1464, %v1303
      %v1497 = vld [vmem:[#allocation2 + $0x117] sm:$0xff]
      %v1498 = vld [vmem:[#allocation2 + $0x11f] sm:$0xff]
      %v1499 = vmul.f32 %v1339, %v860
      %v1500 = vmul.f32 %v1340, %v865
      %v1501 = vmul.f32 %v1341, %v870
      %v1502 = vmul.f32 %v1342, %v875
      %v1503 = vmul.f32 %v1343, %v880
      %v1504 = vmul.f32 %v1344, %v885
      %v1505 = vmul.f32 %v1345, %v890
      %v1506 = vmul.f32 %v1346, %v895
      %v1507 = vmul.f32 %v1347, %v900
      %v1508 = vmul.f32 %v1348, %v905
      %v1509 = vmul.f32 %v1349, %v910
      %v1510 = vmul.f32 %v1350, %v915
      %v1511 = vmul.f32 %v1351, %v920
      %v1512 = vmul.f32 %v1352, %v925
      %v1513 = vmul.f32 %v1353, %v930
      %v1514 = vmul.f32 %v1354, %v935
      %v1515 = vmul.f32 %v1355, %v940
      %v1516 = vmul.f32 %v1356, %v945
      %v1517 = vmul.f32 %v1357, %v950
      %v1518 = vmul.f32 %v1358, %v955
      %v1519 = vmul.f32 %v1359, %v960
      %v1520 = vmul.f32 %v1360, %v965
      %v1521 = vmul.f32 %v1361, %v970
      %v1522 = vmul.f32 %v1362, %v975
      %v1523 = vmul.f32 %v1363, %v980
      %v1524 = vmul.f32 %v1364, %v985
      %v1525 = vmul.f32 %v1365, %v990
      %v1526 = vmul.f32 %v1366, %v995
      %v1527 = vmul.f32 %v1367, %v1000
      %v1528 = vmul.f32 %v1368, %v1005
      %v1529 = vmul.f32 %v1497, %v1010
      %v1530 = vmul.f32 %v1498, %v1015
      %v1531 = vld [vmem:[#allocation2 + $0x118] sm:$0xff]
      %v1532 = vld [vmem:[#allocation2 + $0x120] sm:$0xff]
      %v1533 = vld [vmem:[#allocation2 + $0x119] sm:$0xff]
      %v1534 = vld [vmem:[#allocation2 + $0x121] sm:$0xff]
      %v1535 = vmul.f32 %v1435, %v1148
      %v1536 = vmul.f32 %v1436, %v1153
      %v1537 = vmul.f32 %v1437, %v1158
      %v1538 = vmul.f32 %v1438, %v1163
      %v1539 = vmul.f32 %v1439, %v1168
      %v1540 = vmul.f32 %v1440, %v1173
      %v1541 = vmul.f32 %v1441, %v1178
      %v1542 = vmul.f32 %v1442, %v1183
      %v1543 = vmul.f32 %v1443, %v1188
      %v1544 = vmul.f32 %v1444, %v1193
      %v1545 = vmul.f32 %v1445, %v1198
      %v1546 = vmul.f32 %v1446, %v1203
      %v1547 = vmul.f32 %v1447, %v1208
      %v1548 = vmul.f32 %v1448, %v1213
      %v1549 = vmul.f32 %v1449, %v1218
      %v1550 = vmul.f32 %v1450, %v1223
      %v1551 = vmul.f32 %v1451, %v1228
      %v1552 = vmul.f32 %v1452, %v1233
      %v1553 = vmul.f32 %v1453, %v1238
      %v1554 = vmul.f32 %v1454, %v1243
      %v1555 = vmul.f32 %v1455, %v1248
      %v1556 = vmul.f32 %v1456, %v1253
      %v1557 = vmul.f32 %v1457, %v1258
      %v1558 = vmul.f32 %v1458, %v1263
      %v1559 = vmul.f32 %v1459, %v1268
      %v1560 = vmul.f32 %v1460, %v1273
      %v1561 = vmul.f32 %v1461, %v1278
      %v1562 = vmul.f32 %v1462, %v1283
      %v1563 = vmul.f32 %v1463, %v1288
      %v1564 = vmul.f32 %v1464, %v1293
      %v1565 = vmul.f32 %v1533, %v1298
      %v1566 = vmul.f32 %v1534, %v1303
      %1599 = vrot.lane.b32.xlu0 %v1049, 2
      %v1600 = vpop.permute.xlu0 %1599
      %1601 = vrot.lane.b32.xlu0 %v1050, 2
      %v1602 = vpop.permute.xlu0 %1601
      %1603 = vrot.lane.b32.xlu0 %v1051, 2
      %v1604 = vpop.permute.xlu0 %1603
      %1605 = vrot.lane.b32.xlu0 %v1052, 2
      %v1606 = vpop.permute.xlu0 %1605
      %1607 = vrot.lane.b32.xlu0 %v1053, 2
      %v1608 = vpop.permute.xlu0 %1607
      %1609 = vrot.lane.b32.xlu0 %v1054, 2
      %v1610 = vpop.permute.xlu0 %1609
      %1611 = vrot.lane.b32.xlu0 %v1055, 2
      %v1612 = vpop.permute.xlu0 %1611
      %1613 = vrot.lane.b32.xlu0 %v1056, 2
      %v1614 = vpop.permute.xlu0 %1613
      %1615 = vrot.lane.b32.xlu0 %v1057, 2
      %v1616 = vpop.permute.xlu0 %1615
      %1617 = vrot.lane.b32.xlu0 %v1058, 2
      %v1618 = vpop.permute.xlu0 %1617
      %1619 = vrot.lane.b32.xlu0 %v1059, 2
      %v1620 = vpop.permute.xlu0 %1619
      %1621 = vrot.lane.b32.xlu0 %v1060, 2
      %v1622 = vpop.permute.xlu0 %1621
      %1623 = vrot.lane.b32.xlu0 %v1061, 2
      %v1624 = vpop.permute.xlu0 %1623
      %1625 = vrot.lane.b32.xlu0 %v1062, 2
      %v1626 = vpop.permute.xlu0 %1625
      %1627 = vrot.lane.b32.xlu0 %v1063, 2
      %v1628 = vpop.permute.xlu0 %1627
      %1629 = vrot.lane.b32.xlu0 %v1064, 2
      %v1630 = vpop.permute.xlu0 %1629
      %1631 = vrot.lane.b32.xlu0 %v1065, 2
      %v1632 = vpop.permute.xlu0 %1631
      %1633 = vrot.lane.b32.xlu0 %v1066, 2
      %v1634 = vpop.permute.xlu0 %1633
      %1635 = vrot.lane.b32.xlu0 %v1067, 2
      %v1636 = vpop.permute.xlu0 %1635
      %1637 = vrot.lane.b32.xlu0 %v1068, 2
      %v1638 = vpop.permute.xlu0 %1637
      %1639 = vrot.lane.b32.xlu0 %v1069, 2
      %v1640 = vpop.permute.xlu0 %1639
      %1641 = vrot.lane.b32.xlu0 %v1070, 2
      %v1642 = vpop.permute.xlu0 %1641
      %1643 = vrot.lane.b32.xlu0 %v1071, 2
      %v1644 = vpop.permute.xlu0 %1643
      %1645 = vrot.lane.b32.xlu0 %v1072, 2
      %v1646 = vpop.permute.xlu0 %1645
      %1647 = vrot.lane.b32.xlu0 %v1073, 2
      %v1648 = vpop.permute.xlu0 %1647
      %1649 = vrot.lane.b32.xlu0 %v1074, 2
      %v1650 = vpop.permute.xlu0 %1649
      %1651 = vrot.lane.b32.xlu0 %v1075, 2
      %v1652 = vpop.permute.xlu0 %1651
      %1653 = vrot.lane.b32.xlu0 %v1076, 2
      %v1654 = vpop.permute.xlu0 %1653
      %1655 = vrot.lane.b32.xlu0 %v1077, 2
      %v1656 = vpop.permute.xlu0 %1655
      %1657 = vrot.lane.b32.xlu0 %v1078, 2
      %v1658 = vpop.permute.xlu0 %1657
      %1659 = vrot.lane.b32.xlu0 %v1079, 2
      %v1660 = vpop.permute.xlu0 %1659
      %1661 = vrot.lane.b32.xlu0 %v1080, 2
      %v1662 = vpop.permute.xlu0 %1661
      %1727 = vrot.lane.b32.xlu0 %v1305, 4
      %v1728 = vpop.permute.xlu0 %1727
      %1729 = vrot.lane.b32.xlu0 %v1306, 4
      %v1730 = vpop.permute.xlu0 %1729
      %1731 = vrot.lane.b32.xlu0 %v1307, 4
      %v1732 = vpop.permute.xlu0 %1731
      %1733 = vrot.lane.b32.xlu0 %v1308, 4
      %v1734 = vpop.permute.xlu0 %1733
      %1735 = vrot.lane.b32.xlu0 %v1309, 4
      %v1736 = vpop.permute.xlu0 %1735
      %1737 = vrot.lane.b32.xlu0 %v1310, 4
      %v1738 = vpop.permute.xlu0 %1737
      %1739 = vrot.lane.b32.xlu0 %v1311, 4
      %v1740 = vpop.permute.xlu0 %1739
      %1741 = vrot.lane.b32.xlu0 %v1312, 4
      %v1742 = vpop.permute.xlu0 %1741
      %1743 = vrot.lane.b32.xlu0 %v1313, 4
      %v1744 = vpop.permute.xlu0 %1743
      %1745 = vrot.lane.b32.xlu0 %v1314, 4
      %v1746 = vpop.permute.xlu0 %1745
      %1747 = vrot.lane.b32.xlu0 %v1315, 4
      %v1748 = vpop.permute.xlu0 %1747
      %1749 = vrot.lane.b32.xlu0 %v1316, 4
      %v1750 = vpop.permute.xlu0 %1749
      %1751 = vrot.lane.b32.xlu0 %v1317, 4
      %v1752 = vpop.permute.xlu0 %1751
      %1753 = vrot.lane.b32.xlu0 %v1318, 4
      %v1754 = vpop.permute.xlu0 %1753
      %1755 = vrot.lane.b32.xlu0 %v1319, 4
      %v1756 = vpop.permute.xlu0 %1755
      %1757 = vrot.lane.b32.xlu0 %v1320, 4
      %v1758 = vpop.permute.xlu0 %1757
      %1759 = vrot.lane.b32.xlu0 %v1321, 4
      %v1760 = vpop.permute.xlu0 %1759
      %1761 = vrot.lane.b32.xlu0 %v1322, 4
      %v1762 = vpop.permute.xlu0 %1761
      %1763 = vrot.lane.b32.xlu0 %v1323, 4
      %v1764 = vpop.permute.xlu0 %1763
      %1765 = vrot.lane.b32.xlu0 %v1324, 4
      %v1766 = vpop.permute.xlu0 %1765
      %1767 = vrot.lane.b32.xlu0 %v1325, 4
      %v1768 = vpop.permute.xlu0 %1767
      %1769 = vrot.lane.b32.xlu0 %v1326, 4
      %v1770 = vpop.permute.xlu0 %1769
      %1771 = vrot.lane.b32.xlu0 %v1327, 4
      %v1772 = vpop.permute.xlu0 %1771
      %1773 = vrot.lane.b32.xlu0 %v1328, 4
      %v1774 = vpop.permute.xlu0 %1773
      %1775 = vrot.lane.b32.xlu0 %v1329, 4
      %v1776 = vpop.permute.xlu0 %1775
      %1777 = vrot.lane.b32.xlu0 %v1330, 4
      %v1778 = vpop.permute.xlu0 %1777
      %1779 = vrot.lane.b32.xlu0 %v1331, 4
      %v1780 = vpop.permute.xlu0 %1779
      %1781 = vrot.lane.b32.xlu0 %v1332, 4
      %v1782 = vpop.permute.xlu0 %1781
      %1783 = vrot.lane.b32.xlu0 %v1333, 4
      %v1784 = vpop.permute.xlu0 %1783
      %1785 = vrot.lane.b32.xlu0 %v1334, 4
      %v1786 = vpop.permute.xlu0 %1785
      %1787 = vrot.lane.b32.xlu0 %v1335, 4
      %v1788 = vpop.permute.xlu0 %1787
      %1789 = vrot.lane.b32.xlu0 %v1336, 4
      %v1790 = vpop.permute.xlu0 %1789
      %1855 = vrot.lane.b32.xlu0 %v1369, 6
      %v1856 = vpop.permute.xlu0 %1855
      %1857 = vrot.lane.b32.xlu0 %v1370, 6
      %v1858 = vpop.permute.xlu0 %1857
      %1859 = vrot.lane.b32.xlu0 %v1371, 6
      %v1860 = vpop.permute.xlu0 %1859
      %1861 = vrot.lane.b32.xlu0 %v1372, 6
      %v1862 = vpop.permute.xlu0 %1861
      %1863 = vrot.lane.b32.xlu0 %v1373, 6
      %v1864 = vpop.permute.xlu0 %1863
      %1865 = vrot.lane.b32.xlu0 %v1374, 6
      %v1866 = vpop.permute.xlu0 %1865
      %1867 = vrot.lane.b32.xlu0 %v1375, 6
      %v1868 = vpop.permute.xlu0 %1867
      %1869 = vrot.lane.b32.xlu0 %v1376, 6
      %v1870 = vpop.permute.xlu0 %1869
      %1871 = vrot.lane.b32.xlu0 %v1377, 6
      %v1872 = vpop.permute.xlu0 %1871
      %1873 = vrot.lane.b32.xlu0 %v1378, 6
      %v1874 = vpop.permute.xlu0 %1873
      %1875 = vrot.lane.b32.xlu0 %v1379, 6
      %v1876 = vpop.permute.xlu0 %1875
      %1877 = vrot.lane.b32.xlu0 %v1380, 6
      %v1878 = vpop.permute.xlu0 %1877
      %1879 = vrot.lane.b32.xlu0 %v1381, 6
      %v1880 = vpop.permute.xlu0 %1879
      %1881 = vrot.lane.b32.xlu0 %v1382, 6
      %v1882 = vpop.permute.xlu0 %1881
      %1883 = vrot.lane.b32.xlu0 %v1383, 6
      %v1884 = vpop.permute.xlu0 %1883
      %1885 = vrot.lane.b32.xlu0 %v1384, 6
      %v1886 = vpop.permute.xlu0 %1885
      %1887 = vrot.lane.b32.xlu0 %v1385, 6
      %v1888 = vpop.permute.xlu0 %1887
      %1889 = vrot.lane.b32.xlu0 %v1386, 6
      %v1890 = vpop.permute.xlu0 %1889
      %1891 = vrot.lane.b32.xlu0 %v1387, 6
      %v1892 = vpop.permute.xlu0 %1891
      %1893 = vrot.lane.b32.xlu0 %v1388, 6
      %v1894 = vpop.permute.xlu0 %1893
      %1895 = vrot.lane.b32.xlu0 %v1389, 6
      %v1896 = vpop.permute.xlu0 %1895
      %1897 = vrot.lane.b32.xlu0 %v1390, 6
      %v1898 = vpop.permute.xlu0 %1897
      %1899 = vrot.lane.b32.xlu0 %v1391, 6
      %v1900 = vpop.permute.xlu0 %1899
      %1901 = vrot.lane.b32.xlu0 %v1392, 6
      %v1902 = vpop.permute.xlu0 %1901
      %1903 = vrot.lane.b32.xlu0 %v1393, 6
      %v1904 = vpop.permute.xlu0 %1903
      %1905 = vrot.lane.b32.xlu0 %v1394, 6
      %v1906 = vpop.permute.xlu0 %1905
      %1907 = vrot.lane.b32.xlu0 %v1395, 6
      %v1908 = vpop.permute.xlu0 %1907
      %1909 = vrot.lane.b32.xlu0 %v1396, 6
      %v1910 = vpop.permute.xlu0 %1909
      %1911 = vrot.lane.b32.xlu0 %v1397, 6
      %v1912 = vpop.permute.xlu0 %1911
      %1913 = vrot.lane.b32.xlu0 %v1398, 6
      %v1914 = vpop.permute.xlu0 %1913
      %1915 = vrot.lane.b32.xlu0 %v1399, 6
      %v1916 = vpop.permute.xlu0 %1915
      %1917 = vrot.lane.b32.xlu0 %v1400, 6
      %v1918 = vpop.permute.xlu0 %1917
      %1983 = vrot.lane.b32.xlu0 %v1401, 8
      %v1984 = vpop.permute.xlu0 %1983
      %1985 = vrot.lane.b32.xlu0 %v1402, 8
      %v1986 = vpop.permute.xlu0 %1985
      %1987 = vrot.lane.b32.xlu0 %v1403, 8
      %v1988 = vpop.permute.xlu0 %1987
      %1989 = vrot.lane.b32.xlu0 %v1404, 8
      %v1990 = vpop.permute.xlu0 %1989
      %1991 = vrot.lane.b32.xlu0 %v1405, 8
      %v1992 = vpop.permute.xlu0 %1991
      %1993 = vrot.lane.b32.xlu0 %v1406, 8
      %v1994 = vpop.permute.xlu0 %1993
      %1995 = vrot.lane.b32.xlu0 %v1407, 8
      %v1996 = vpop.permute.xlu0 %1995
      %1997 = vrot.lane.b32.xlu0 %v1408, 8
      %v1998 = vpop.permute.xlu0 %1997
      %1999 = vrot.lane.b32.xlu0 %v1409, 8
      %v2000 = vpop.permute.xlu0 %1999
      %2001 = vrot.lane.b32.xlu0 %v1410, 8
      %v2002 = vpop.permute.xlu0 %2001
      %2003 = vrot.lane.b32.xlu0 %v1411, 8
      %v2004 = vpop.permute.xlu0 %2003
      %2005 = vrot.lane.b32.xlu0 %v1412, 8
      %v2006 = vpop.permute.xlu0 %2005
      %2007 = vrot.lane.b32.xlu0 %v1413, 8
      %v2008 = vpop.permute.xlu0 %2007
      %2009 = vrot.lane.b32.xlu0 %v1414, 8
      %v2010 = vpop.permute.xlu0 %2009
      %2011 = vrot.lane.b32.xlu0 %v1415, 8
      %v2012 = vpop.permute.xlu0 %2011
      %2013 = vrot.lane.b32.xlu0 %v1416, 8
      %v2014 = vpop.permute.xlu0 %2013
      %2015 = vrot.lane.b32.xlu0 %v1417, 8
      %v2016 = vpop.permute.xlu0 %2015
      %2017 = vrot.lane.b32.xlu0 %v1418, 8
      %v2018 = vpop.permute.xlu0 %2017
      %2019 = vrot.lane.b32.xlu0 %v1419, 8
      %v2020 = vpop.permute.xlu0 %2019
      %2021 = vrot.lane.b32.xlu0 %v1420, 8
      %v2022 = vpop.permute.xlu0 %2021
      %2023 = vrot.lane.b32.xlu0 %v1421, 8
      %v2024 = vpop.permute.xlu0 %2023
      %2025 = vrot.lane.b32.xlu0 %v1422, 8
      %v2026 = vpop.permute.xlu0 %2025
      %2027 = vrot.lane.b32.xlu0 %v1423, 8
      %v2028 = vpop.permute.xlu0 %2027
      %2029 = vrot.lane.b32.xlu0 %v1424, 8
      %v2030 = vpop.permute.xlu0 %2029
      %2031 = vrot.lane.b32.xlu0 %v1425, 8
      %v2032 = vpop.permute.xlu0 %2031
      %2033 = vrot.lane.b32.xlu0 %v1426, 8
      %v2034 = vpop.permute.xlu0 %2033
      %2035 = vrot.lane.b32.xlu0 %v1427, 8
      %v2036 = vpop.permute.xlu0 %2035
      %2037 = vrot.lane.b32.xlu0 %v1428, 8
      %v2038 = vpop.permute.xlu0 %2037
      %2039 = vrot.lane.b32.xlu0 %v1429, 8
      %v2040 = vpop.permute.xlu0 %2039
      %2041 = vrot.lane.b32.xlu0 %v1430, 8
      %v2042 = vpop.permute.xlu0 %2041
      %2043 = vrot.lane.b32.xlu0 %v1431, 8
      %v2044 = vpop.permute.xlu0 %2043
      %2045 = vrot.lane.b32.xlu0 %v1432, 8
      %v2046 = vpop.permute.xlu0 %2045
      %2111 = vrot.lane.b32.xlu0 %v1465, 10
      %v2112 = vpop.permute.xlu0 %2111
      %2113 = vrot.lane.b32.xlu0 %v1466, 10
      %v2114 = vpop.permute.xlu0 %2113
      %2115 = vrot.lane.b32.xlu0 %v1467, 10
      %v2116 = vpop.permute.xlu0 %2115
      %2117 = vrot.lane.b32.xlu0 %v1468, 10
      %v2118 = vpop.permute.xlu0 %2117
      %2119 = vrot.lane.b32.xlu0 %v1469, 10
      %v2120 = vpop.permute.xlu0 %2119
      %2121 = vrot.lane.b32.xlu0 %v1470, 10
      %v2122 = vpop.permute.xlu0 %2121
      %2123 = vrot.lane.b32.xlu0 %v1471, 10
      %v2124 = vpop.permute.xlu0 %2123
      %2125 = vrot.lane.b32.xlu0 %v1472, 10
      %v2126 = vpop.permute.xlu0 %2125
      %2127 = vrot.lane.b32.xlu0 %v1473, 10
      %v2128 = vpop.permute.xlu0 %2127
      %2129 = vrot.lane.b32.xlu0 %v1474, 10
      %v2130 = vpop.permute.xlu0 %2129
      %2131 = vrot.lane.b32.xlu0 %v1475, 10
      %v2132 = vpop.permute.xlu0 %2131
      %2133 = vrot.lane.b32.xlu0 %v1476, 10
      %v2134 = vpop.permute.xlu0 %2133
      %2135 = vrot.lane.b32.xlu0 %v1477, 10
      %v2136 = vpop.permute.xlu0 %2135
      %2137 = vrot.lane.b32.xlu0 %v1478, 10
      %v2138 = vpop.permute.xlu0 %2137
      %2139 = vrot.lane.b32.xlu0 %v1479, 10
      %v2140 = vpop.permute.xlu0 %2139
      %2141 = vrot.lane.b32.xlu0 %v1480, 10
      %v2142 = vpop.permute.xlu0 %2141
      %2143 = vrot.lane.b32.xlu0 %v1481, 10
      %v2144 = vpop.permute.xlu0 %2143
      %2145 = vrot.lane.b32.xlu0 %v1482, 10
      %v2146 = vpop.permute.xlu0 %2145
      %2147 = vrot.lane.b32.xlu0 %v1483, 10
      %v2148 = vpop.permute.xlu0 %2147
      %2149 = vrot.lane.b32.xlu0 %v1484, 10
      %v2150 = vpop.permute.xlu0 %2149
      %2151 = vrot.lane.b32.xlu0 %v1485, 10
      %v2152 = vpop.permute.xlu0 %2151
      %2153 = vrot.lane.b32.xlu0 %v1486, 10
      %v2154 = vpop.permute.xlu0 %2153
      %2155 = vrot.lane.b32.xlu0 %v1487, 10
      %v2156 = vpop.permute.xlu0 %2155
      %2157 = vrot.lane.b32.xlu0 %v1488, 10
      %v2158 = vpop.permute.xlu0 %2157
      %2159 = vrot.lane.b32.xlu0 %v1489, 10
      %v2160 = vpop.permute.xlu0 %2159
      %2161 = vrot.lane.b32.xlu0 %v1490, 10
      %v2162 = vpop.permute.xlu0 %2161
      %2163 = vrot.lane.b32.xlu0 %v1491, 10
      %v2164 = vpop.permute.xlu0 %2163
      %2165 = vrot.lane.b32.xlu0 %v1492, 10
      %v2166 = vpop.permute.xlu0 %2165
      %2167 = vrot.lane.b32.xlu0 %v1493, 10
      %v2168 = vpop.permute.xlu0 %2167
      %2169 = vrot.lane.b32.xlu0 %v1494, 10
      %v2170 = vpop.permute.xlu0 %2169
      %2171 = vrot.lane.b32.xlu0 %v1495, 10
      %v2172 = vpop.permute.xlu0 %2171
      %2173 = vrot.lane.b32.xlu0 %v1496, 10
      %v2174 = vpop.permute.xlu0 %2173
      %2239 = vrot.lane.b32.xlu0 %v1499, 12
      %v2240 = vpop.permute.xlu0 %2239
      %2241 = vrot.lane.b32.xlu0 %v1500, 12
      %v2242 = vpop.permute.xlu0 %2241
      %2243 = vrot.lane.b32.xlu0 %v1501, 12
      %v2244 = vpop.permute.xlu0 %2243
      %2245 = vrot.lane.b32.xlu0 %v1502, 12
      %v2246 = vpop.permute.xlu0 %2245
      %2247 = vrot.lane.b32.xlu0 %v1503, 12
      %v2248 = vpop.permute.xlu0 %2247
      %2249 = vrot.lane.b32.xlu0 %v1504, 12
      %v2250 = vpop.permute.xlu0 %2249
      %2251 = vrot.lane.b32.xlu0 %v1505, 12
      %v2252 = vpop.permute.xlu0 %2251
      %2253 = vrot.lane.b32.xlu0 %v1506, 12
      %v2254 = vpop.permute.xlu0 %2253
      %2255 = vrot.lane.b32.xlu0 %v1507, 12
      %v2256 = vpop.permute.xlu0 %2255
      %2257 = vrot.lane.b32.xlu0 %v1508, 12
      %v2258 = vpop.permute.xlu0 %2257
      %2259 = vrot.lane.b32.xlu0 %v1509, 12
      %v2260 = vpop.permute.xlu0 %2259
      %2261 = vrot.lane.b32.xlu0 %v1510, 12
      %v2262 = vpop.permute.xlu0 %2261
      %2263 = vrot.lane.b32.xlu0 %v1511, 12
      %v2264 = vpop.permute.xlu0 %2263
      %2265 = vrot.lane.b32.xlu0 %v1512, 12
      %v2266 = vpop.permute.xlu0 %2265
      %2267 = vrot.lane.b32.xlu0 %v1513, 12
      %v2268 = vpop.permute.xlu0 %2267
      %2269 = vrot.lane.b32.xlu0 %v1514, 12
      %v2270 = vpop.permute.xlu0 %2269
      %2271 = vrot.lane.b32.xlu0 %v1515, 12
      %v2272 = vpop.permute.xlu0 %2271
      %2273 = vrot.lane.b32.xlu0 %v1516, 12
      %v2274 = vpop.permute.xlu0 %2273
      %2275 = vrot.lane.b32.xlu0 %v1517, 12
      %v2276 = vpop.permute.xlu0 %2275
      %2277 = vrot.lane.b32.xlu0 %v1518, 12
      %v2278 = vpop.permute.xlu0 %2277
      %2279 = vrot.lane.b32.xlu0 %v1519, 12
      %v2280 = vpop.permute.xlu0 %2279
      %2281 = vrot.lane.b32.xlu0 %v1520, 12
      %v2282 = vpop.permute.xlu0 %2281
      %2283 = vrot.lane.b32.xlu0 %v1521, 12
      %v2284 = vpop.permute.xlu0 %2283
      %2285 = vrot.lane.b32.xlu0 %v1522, 12
      %v2286 = vpop.permute.xlu0 %2285
      %2287 = vrot.lane.b32.xlu0 %v1523, 12
      %v2288 = vpop.permute.xlu0 %2287
      %2289 = vrot.lane.b32.xlu0 %v1524, 12
      %v2290 = vpop.permute.xlu0 %2289
      %2291 = vrot.lane.b32.xlu0 %v1525, 12
      %v2292 = vpop.permute.xlu0 %2291
      %2293 = vrot.lane.b32.xlu0 %v1526, 12
      %v2294 = vpop.permute.xlu0 %2293
      %2295 = vrot.lane.b32.xlu0 %v1527, 12
      %v2296 = vpop.permute.xlu0 %2295
      %2297 = vrot.lane.b32.xlu0 %v1528, 12
      %v2298 = vpop.permute.xlu0 %2297
      %2299 = vrot.lane.b32.xlu0 %v1529, 12
      %v2300 = vpop.permute.xlu0 %2299
      %2301 = vrot.lane.b32.xlu0 %v1530, 12
      %v2302 = vpop.permute.xlu0 %2301
      %2337 = vrot.lane.b32.xlu0 %v1403, 14
      %v2338 = vpop.permute.xlu0 %2337
      %2339 = vrot.lane.b32.xlu0 %v1404, 14
      %v2340 = vpop.permute.xlu0 %2339
      %2341 = vrot.lane.b32.xlu0 %v1405, 14
      %v2342 = vpop.permute.xlu0 %2341
      %2343 = vrot.lane.b32.xlu0 %v1406, 14
      %v2344 = vpop.permute.xlu0 %2343
      %2345 = vrot.lane.b32.xlu0 %v1407, 14
      %v2346 = vpop.permute.xlu0 %2345
      %2347 = vrot.lane.b32.xlu0 %v1408, 14
      %v2348 = vpop.permute.xlu0 %2347
      %2349 = vrot.lane.b32.xlu0 %v1409, 14
      %v2350 = vpop.permute.xlu0 %2349
      %2351 = vrot.lane.b32.xlu0 %v1410, 14
      %v2352 = vpop.permute.xlu0 %2351
      %2353 = vrot.lane.b32.xlu0 %v1411, 14
      %v2354 = vpop.permute.xlu0 %2353
      %2355 = vrot.lane.b32.xlu0 %v1412, 14
      %v2356 = vpop.permute.xlu0 %2355
      %2357 = vrot.lane.b32.xlu0 %v1413, 14
      %v2358 = vpop.permute.xlu0 %2357
      %2359 = vrot.lane.b32.xlu0 %v1414, 14
      %v2360 = vpop.permute.xlu0 %2359
      %2361 = vrot.lane.b32.xlu0 %v1415, 14
      %v2362 = vpop.permute.xlu0 %2361
      %2363 = vrot.lane.b32.xlu0 %v1416, 14
      %v2364 = vpop.permute.xlu0 %2363
      %2365 = vrot.lane.b32.xlu0 %v1417, 14
      %v2366 = vpop.permute.xlu0 %2365
      %2367 = vrot.lane.b32.xlu0 %v1418, 14
      %v2368 = vpop.permute.xlu0 %2367
      %2369 = vrot.lane.b32.xlu0 %v1419, 14
      %v2370 = vpop.permute.xlu0 %2369
      %2371 = vrot.lane.b32.xlu0 %v1420, 14
      %v2372 = vpop.permute.xlu0 %2371
      %2373 = vrot.lane.b32.xlu0 %v1421, 14
      %v2374 = vpop.permute.xlu0 %2373
      %2375 = vrot.lane.b32.xlu0 %v1422, 14
      %v2376 = vpop.permute.xlu0 %2375
      %2377 = vrot.lane.b32.xlu0 %v1423, 14
      %v2378 = vpop.permute.xlu0 %2377
      %2379 = vrot.lane.b32.xlu0 %v1424, 14
      %v2380 = vpop.permute.xlu0 %2379
      %2381 = vrot.lane.b32.xlu0 %v1425, 14
      %v2382 = vpop.permute.xlu0 %2381
      %2383 = vrot.lane.b32.xlu0 %v1426, 14
      %v2384 = vpop.permute.xlu0 %2383
      %2385 = vrot.lane.b32.xlu0 %v1427, 14
      %v2386 = vpop.permute.xlu0 %2385
      %2387 = vrot.lane.b32.xlu0 %v1428, 14
      %v2388 = vpop.permute.xlu0 %2387
      %2389 = vrot.lane.b32.xlu0 %v1429, 14
      %v2390 = vpop.permute.xlu0 %2389
      %2391 = vrot.lane.b32.xlu0 %v1430, 14
      %v2392 = vpop.permute.xlu0 %2391
      %2393 = vrot.lane.b32.xlu0 %v1431, 14
      %v2394 = vpop.permute.xlu0 %2393
      %2395 = vrot.lane.b32.xlu0 %v1432, 14
      %v2396 = vpop.permute.xlu0 %2395
      %2397 = vrot.lane.b32.xlu0 %v1531, 14
      %v2398 = vpop.permute.xlu0 %2397
      %2399 = vrot.lane.b32.xlu0 %v1532, 14
      %v2400 = vpop.permute.xlu0 %2399
      %2465 = vrot.lane.b32.xlu0 %v1535, 16
      %v2466 = vpop.permute.xlu0 %2465
      %2467 = vrot.lane.b32.xlu0 %v1536, 16
      %v2468 = vpop.permute.xlu0 %2467
      %2469 = vrot.lane.b32.xlu0 %v1537, 16
      %v2470 = vpop.permute.xlu0 %2469
      %2471 = vrot.lane.b32.xlu0 %v1538, 16
      %v2472 = vpop.permute.xlu0 %2471
      %2473 = vrot.lane.b32.xlu0 %v1539, 16
      %v2474 = vpop.permute.xlu0 %2473
      %2475 = vrot.lane.b32.xlu0 %v1540, 16
      %v2476 = vpop.permute.xlu0 %2475
      %2477 = vrot.lane.b32.xlu0 %v1541, 16
      %v2478 = vpop.permute.xlu0 %2477
      %2479 = vrot.lane.b32.xlu0 %v1542, 16
      %v2480 = vpop.permute.xlu0 %2479
      %2481 = vrot.lane.b32.xlu0 %v1543, 16
      %v2482 = vpop.permute.xlu0 %2481
      %2483 = vrot.lane.b32.xlu0 %v1544, 16
      %v2484 = vpop.permute.xlu0 %2483
      %2485 = vrot.lane.b32.xlu0 %v1545, 16
      %v2486 = vpop.permute.xlu0 %2485
      %2487 = vrot.lane.b32.xlu0 %v1546, 16
      %v2488 = vpop.permute.xlu0 %2487
      %2489 = vrot.lane.b32.xlu0 %v1547, 16
      %v2490 = vpop.permute.xlu0 %2489
      %2491 = vrot.lane.b32.xlu0 %v1548, 16
      %v2492 = vpop.permute.xlu0 %2491
      %2493 = vrot.lane.b32.xlu0 %v1549, 16
      %v2494 = vpop.permute.xlu0 %2493
      %2495 = vrot.lane.b32.xlu0 %v1550, 16
      %v2496 = vpop.permute.xlu0 %2495
      %2497 = vrot.lane.b32.xlu0 %v1551, 16
      %v2498 = vpop.permute.xlu0 %2497
      %2499 = vrot.lane.b32.xlu0 %v1552, 16
      %v2500 = vpop.permute.xlu0 %2499
      %2501 = vrot.lane.b32.xlu0 %v1553, 16
      %v2502 = vpop.permute.xlu0 %2501
      %2503 = vrot.lane.b32.xlu0 %v1554, 16
      %v2504 = vpop.permute.xlu0 %2503
      %2505 = vrot.lane.b32.xlu0 %v1555, 16
      %v2506 = vpop.permute.xlu0 %2505
      %2507 = vrot.lane.b32.xlu0 %v1556, 16
      %v2508 = vpop.permute.xlu0 %2507
      %2509 = vrot.lane.b32.xlu0 %v1557, 16
      %v2510 = vpop.permute.xlu0 %2509
      %2511 = vrot.lane.b32.xlu0 %v1558, 16
      %v2512 = vpop.permute.xlu0 %2511
      %2513 = vrot.lane.b32.xlu0 %v1559, 16
      %v2514 = vpop.permute.xlu0 %2513
      %2515 = vrot.lane.b32.xlu0 %v1560, 16
      %v2516 = vpop.permute.xlu0 %2515
      %2517 = vrot.lane.b32.xlu0 %v1561, 16
      %v2518 = vpop.permute.xlu0 %2517
      %2519 = vrot.lane.b32.xlu0 %v1562, 16
      %v2520 = vpop.permute.xlu0 %2519
      %2521 = vrot.lane.b32.xlu0 %v1563, 16
      %v2522 = vpop.permute.xlu0 %2521
      %2523 = vrot.lane.b32.xlu0 %v1564, 16
      %v2524 = vpop.permute.xlu0 %2523
      %2525 = vrot.lane.b32.xlu0 %v1565, 16
      %v2526 = vpop.permute.xlu0 %2525
      %2527 = vrot.lane.b32.xlu0 %v1566, 16
      %v2528 = vpop.permute.xlu0 %2527
      %v2561 = vsel %vm722, %v1017, %v1600
      %v2562 = vsel %vm722, %v1018, %v1602
      %v2563 = vsel %vm722, %v1019, %v1604
      %v2564 = vsel %vm722, %v1020, %v1606
      %v2565 = vsel %vm722, %v1021, %v1608
      %v2566 = vsel %vm722, %v1022, %v1610
      %v2567 = vsel %vm722, %v1023, %v1612
      %v2568 = vsel %vm722, %v1024, %v1614
      %v2569 = vsel %vm722, %v1025, %v1616
      %v2570 = vsel %vm722, %v1026, %v1618
      %v2571 = vsel %vm722, %v1027, %v1620
      %v2572 = vsel %vm722, %v1028, %v1622
      %v2573 = vsel %vm722, %v1029, %v1624
      %v2574 = vsel %vm722, %v1030, %v1626
      %v2575 = vsel %vm722, %v1031, %v1628
      %v2576 = vsel %vm722, %v1032, %v1630
      %v2577 = vsel %vm722, %v1033, %v1632
      %v2578 = vsel %vm722, %v1034, %v1634
      %v2579 = vsel %vm722, %v1035, %v1636
      %v2580 = vsel %vm722, %v1036, %v1638
      %v2581 = vsel %vm722, %v1037, %v1640
      %v2582 = vsel %vm722, %v1038, %v1642
      %v2583 = vsel %vm722, %v1039, %v1644
      %v2584 = vsel %vm722, %v1040, %v1646
      %v2585 = vsel %vm722, %v1041, %v1648
      %v2586 = vsel %vm722, %v1042, %v1650
      %v2587 = vsel %vm722, %v1043, %v1652
      %v2588 = vsel %vm722, %v1044, %v1654
      %v2589 = vsel %vm722, %v1045, %v1656
      %v2590 = vsel %vm722, %v1046, %v1658
      %v2591 = vsel %vm722, %v1047, %v1660
      %v2592 = vsel %vm722, %v1048, %v1662
      %v2593 = vsel %vm316, %v2561, %v1728
      %v2594 = vsel %vm316, %v2562, %v1730
      %v2595 = vsel %vm316, %v2563, %v1732
      %v2596 = vsel %vm316, %v2564, %v1734
      %v2597 = vsel %vm316, %v2565, %v1736
      %v2598 = vsel %vm316, %v2566, %v1738
      %v2599 = vsel %vm316, %v2567, %v1740
      %v2600 = vsel %vm316, %v2568, %v1742
      %v2601 = vsel %vm316, %v2569, %v1744
      %v2602 = vsel %vm316, %v2570, %v1746
      %v2603 = vsel %vm316, %v2571, %v1748
      %v2604 = vsel %vm316, %v2572, %v1750
      %v2605 = vsel %vm316, %v2573, %v1752
      %v2606 = vsel %vm316, %v2574, %v1754
      %v2607 = vsel %vm316, %v2575, %v1756
      %v2608 = vsel %vm316, %v2576, %v1758
      %v2609 = vsel %vm316, %v2577, %v1760
      %v2610 = vsel %vm316, %v2578, %v1762
      %v2611 = vsel %vm316, %v2579, %v1764
      %v2612 = vsel %vm316, %v2580, %v1766
      %v2613 = vsel %vm316, %v2581, %v1768
      %v2614 = vsel %vm316, %v2582, %v1770
      %v2615 = vsel %vm316, %v2583, %v1772
      %v2616 = vsel %vm316, %v2584, %v1774
      %v2617 = vsel %vm316, %v2585, %v1776
      %v2618 = vsel %vm316, %v2586, %v1778
      %v2619 = vsel %vm316, %v2587, %v1780
      %v2620 = vsel %vm316, %v2588, %v1782
      %v2621 = vsel %vm316, %v2589, %v1784
      %v2622 = vsel %vm316, %v2590, %v1786
      %v2623 = vsel %vm316, %v2591, %v1788
      %v2624 = vsel %vm316, %v2592, %v1790
      %vm2625 = vcmask 48128
      %v2626 = vsel %vm2625, %v2593, %v1856
      %v2627 = vsel %vm2625, %v2594, %v1858
      %v2628 = vsel %vm2625, %v2595, %v1860
      %v2629 = vsel %vm2625, %v2596, %v1862
      %v2630 = vsel %vm2625, %v2597, %v1864
      %v2631 = vsel %vm2625, %v2598, %v1866
      %v2632 = vsel %vm2625, %v2599, %v1868
      %v2633 = vsel %vm2625, %v2600, %v1870
      %v2634 = vsel %vm2625, %v2601, %v1872
      %v2635 = vsel %vm2625, %v2602, %v1874
      %v2636 = vsel %vm2625, %v2603, %v1876
      %v2637 = vsel %vm2625, %v2604, %v1878
      %v2638 = vsel %vm2625, %v2605, %v1880
      %v2639 = vsel %vm2625, %v2606, %v1882
      %v2640 = vsel %vm2625, %v2607, %v1884
      %v2641 = vsel %vm2625, %v2608, %v1886
      %v2642 = vsel %vm2625, %v2609, %v1888
      %v2643 = vsel %vm2625, %v2610, %v1890
      %v2644 = vsel %vm2625, %v2611, %v1892
      %v2645 = vsel %vm2625, %v2612, %v1894
      %v2646 = vsel %vm2625, %v2613, %v1896
      %v2647 = vsel %vm2625, %v2614, %v1898
      %v2648 = vsel %vm2625, %v2615, %v1900
      %v2649 = vsel %vm2625, %v2616, %v1902
      %v2650 = vsel %vm2625, %v2617, %v1904
      %v2651 = vsel %vm2625, %v2618, %v1906
      %v2652 = vsel %vm2625, %v2619, %v1908
      %v2653 = vsel %vm2625, %v2620, %v1910
      %v2654 = vsel %vm2625, %v2621, %v1912
      %v2655 = vsel %vm2625, %v2622, %v1914
      %v2656 = vsel %vm2625, %v2623, %v1916
      %v2657 = vsel %vm2625, %v2624, %v1918
      %vm2658 = vcmask 64512
      %v2659 = vsel %vm2658, %v2626, %v1984
      %v2660 = vsel %vm2658, %v2627, %v1986
      %v2661 = vsel %vm2658, %v2628, %v1988
      %v2662 = vsel %vm2658, %v2629, %v1990
      %v2663 = vsel %vm2658, %v2630, %v1992
      %v2664 = vsel %vm2658, %v2631, %v1994
      %v2665 = vsel %vm2658, %v2632, %v1996
      %v2666 = vsel %vm2658, %v2633, %v1998
      %v2667 = vsel %vm2658, %v2634, %v2000
      %v2668 = vsel %vm2658, %v2635, %v2002
      %v2669 = vsel %vm2658, %v2636, %v2004
      %v2670 = vsel %vm2658, %v2637, %v2006
      %v2671 = vsel %vm2658, %v2638, %v2008
      %v2672 = vsel %vm2658, %v2639, %v2010
      %v2673 = vsel %vm2658, %v2640, %v2012
      %v2674 = vsel %vm2658, %v2641, %v2014
      %v2675 = vsel %vm2658, %v2642, %v2016
      %v2676 = vsel %vm2658, %v2643, %v2018
      %v2677 = vsel %vm2658, %v2644, %v2020
      %v2678 = vsel %vm2658, %v2645, %v2022
      %v2679 = vsel %vm2658, %v2646, %v2024
      %v2680 = vsel %vm2658, %v2647, %v2026
      %v2681 = vsel %vm2658, %v2648, %v2028
      %v2682 = vsel %vm2658, %v2649, %v2030
      %v2683 = vsel %vm2658, %v2650, %v2032
      %v2684 = vsel %vm2658, %v2651, %v2034
      %v2685 = vsel %vm2658, %v2652, %v2036
      %v2686 = vsel %vm2658, %v2653, %v2038
      %v2687 = vsel %vm2658, %v2654, %v2040
      %v2688 = vsel %vm2658, %v2655, %v2042
      %v2689 = vsel %vm2658, %v2656, %v2044
      %v2690 = vsel %vm2658, %v2657, %v2046
      %vm2691 = vcmask 80896
      %v2692 = vsel %vm2691, %v2659, %v2112
      %v2693 = vsel %vm2691, %v2660, %v2114
      %v2694 = vsel %vm2691, %v2661, %v2116
      %v2695 = vsel %vm2691, %v2662, %v2118
      %v2696 = vsel %vm2691, %v2663, %v2120
      %v2697 = vsel %vm2691, %v2664, %v2122
      %v2698 = vsel %vm2691, %v2665, %v2124
      %v2699 = vsel %vm2691, %v2666, %v2126
      %v2700 = vsel %vm2691, %v2667, %v2128
      %v2701 = vsel %vm2691, %v2668, %v2130
      %v2702 = vsel %vm2691, %v2669, %v2132
      %v2703 = vsel %vm2691, %v2670, %v2134
      %v2704 = vsel %vm2691, %v2671, %v2136
      %v2705 = vsel %vm2691, %v2672, %v2138
      %v2706 = vsel %vm2691, %v2673, %v2140
      %v2707 = vsel %vm2691, %v2674, %v2142
      %v2708 = vsel %vm2691, %v2675, %v2144
      %v2709 = vsel %vm2691, %v2676, %v2146
      %v2710 = vsel %vm2691, %v2677, %v2148
      %v2711 = vsel %vm2691, %v2678, %v2150
      %v2712 = vsel %vm2691, %v2679, %v2152
      %v2713 = vsel %vm2691, %v2680, %v2154
      %v2714 = vsel %vm2691, %v2681, %v2156
      %v2715 = vsel %vm2691, %v2682, %v2158
      %v2716 = vsel %vm2691, %v2683, %v2160
      %v2717 = vsel %vm2691, %v2684, %v2162
      %v2718 = vsel %vm2691, %v2685, %v2164
      %v2719 = vsel %vm2691, %v2686, %v2166
      %v2720 = vsel %vm2691, %v2687, %v2168
      %v2721 = vsel %vm2691, %v2688, %v2170
      %v2722 = vsel %vm2691, %v2689, %v2172
      %v2723 = vsel %vm2691, %v2690, %v2174
      %vm2724 = vcmask 97280
      %v2725 = vsel %vm2724, %v2692, %v2240
      %v2726 = vsel %vm2724, %v2693, %v2242
      %v2727 = vsel %vm2724, %v2694, %v2244
      %v2728 = vsel %vm2724, %v2695, %v2246
      %v2729 = vsel %vm2724, %v2696, %v2248
      %v2730 = vsel %vm2724, %v2697, %v2250
      %v2731 = vsel %vm2724, %v2698, %v2252
      %v2732 = vsel %vm2724, %v2699, %v2254
      %v2733 = vsel %vm2724, %v2700, %v2256
      %v2734 = vsel %vm2724, %v2701, %v2258
      %v2735 = vsel %vm2724, %v2702, %v2260
      %v2736 = vsel %vm2724, %v2703, %v2262
      %v2737 = vsel %vm2724, %v2704, %v2264
      %v2738 = vsel %vm2724, %v2705, %v2266
      %v2739 = vsel %vm2724, %v2706, %v2268
      %v2740 = vsel %vm2724, %v2707, %v2270
      %v2741 = vsel %vm2724, %v2708, %v2272
      %v2742 = vsel %vm2724, %v2709, %v2274
      %v2743 = vsel %vm2724, %v2710, %v2276
      %v2744 = vsel %vm2724, %v2711, %v2278
      %v2745 = vsel %vm2724, %v2712, %v2280
      %v2746 = vsel %vm2724, %v2713, %v2282
      %v2747 = vsel %vm2724, %v2714, %v2284
      %v2748 = vsel %vm2724, %v2715, %v2286
      %v2749 = vsel %vm2724, %v2716, %v2288
      %v2750 = vsel %vm2724, %v2717, %v2290
      %v2751 = vsel %vm2724, %v2718, %v2292
      %v2752 = vsel %vm2724, %v2719, %v2294
      %v2753 = vsel %vm2724, %v2720, %v2296
      %v2754 = vsel %vm2724, %v2721, %v2298
      %v2755 = vsel %vm2724, %v2722, %v2300
      %v2756 = vsel %vm2724, %v2723, %v2302
      %vm2757 = vcmask 113664
      %v2758 = vsel %vm2757, %v2725, %v2338
      %v2759 = vsel %vm2757, %v2726, %v2340
      %v2760 = vsel %vm2757, %v2727, %v2342
      %v2761 = vsel %vm2757, %v2728, %v2344
      %v2762 = vsel %vm2757, %v2729, %v2346
      %v2763 = vsel %vm2757, %v2730, %v2348
      %v2764 = vsel %vm2757, %v2731, %v2350
      %v2765 = vsel %vm2757, %v2732, %v2352
      %v2766 = vsel %vm2757, %v2733, %v2354
      %v2767 = vsel %vm2757, %v2734, %v2356
      %v2768 = vsel %vm2757, %v2735, %v2358
      %v2769 = vsel %vm2757, %v2736, %v2360
      %v2770 = vsel %vm2757, %v2737, %v2362
      %v2771 = vsel %vm2757, %v2738, %v2364
      %v2772 = vsel %vm2757, %v2739, %v2366
      %v2773 = vsel %vm2757, %v2740, %v2368
      %v2774 = vsel %vm2757, %v2741, %v2370
      %v2775 = vsel %vm2757, %v2742, %v2372
      %v2776 = vsel %vm2757, %v2743, %v2374
      %v2777 = vsel %vm2757, %v2744, %v2376
      %v2778 = vsel %vm2757, %v2745, %v2378
      %v2779 = vsel %vm2757, %v2746, %v2380
      %v2780 = vsel %vm2757, %v2747, %v2382
      %v2781 = vsel %vm2757, %v2748, %v2384
      %v2782 = vsel %vm2757, %v2749, %v2386
      %v2783 = vsel %vm2757, %v2750, %v2388
      %v2784 = vsel %vm2757, %v2751, %v2390
      %v2785 = vsel %vm2757, %v2752, %v2392
      %v2786 = vsel %vm2757, %v2753, %v2394
      %v2787 = vsel %vm2757, %v2754, %v2396
      %v2788 = vsel %vm2757, %v2755, %v2398
      %v2789 = vsel %vm2757, %v2756, %v2400
      %vm2790 = vcmask 130048
      %v2791 = vsel %vm2790, %v2758, %v2466
      %v2792 = vsel %vm2790, %v2759, %v2468
      %v2793 = vsel %vm2790, %v2760, %v2470
      %v2794 = vsel %vm2790, %v2761, %v2472
      %v2795 = vsel %vm2790, %v2762, %v2474
      %v2796 = vsel %vm2790, %v2763, %v2476
      %v2797 = vsel %vm2790, %v2764, %v2478
      %v2798 = vsel %vm2790, %v2765, %v2480
      %v2799 = vsel %vm2790, %v2766, %v2482
      %v2800 = vsel %vm2790, %v2767, %v2484
      %v2801 = vsel %vm2790, %v2768, %v2486
      %v2802 = vsel %vm2790, %v2769, %v2488
      %v2803 = vsel %vm2790, %v2770, %v2490
      %v2804 = vsel %vm2790, %v2771, %v2492
      %v2805 = vsel %vm2790, %v2772, %v2494
      %v2806 = vsel %vm2790, %v2773, %v2496
      %v2807 = vsel %vm2790, %v2774, %v2498
      %v2808 = vsel %vm2790, %v2775, %v2500
      %v2809 = vsel %vm2790, %v2776, %v2502
      %v2810 = vsel %vm2790, %v2777, %v2504
      %v2811 = vsel %vm2790, %v2778, %v2506
      %v2812 = vsel %vm2790, %v2779, %v2508
      %v2813 = vsel %vm2790, %v2780, %v2510
      %v2814 = vsel %vm2790, %v2781, %v2512
      %v2815 = vsel %vm2790, %v2782, %v2514
      %v2816 = vsel %vm2790, %v2783, %v2516
      %v2817 = vsel %vm2790, %v2784, %v2518
      %v2818 = vsel %vm2790, %v2785, %v2520
      %v2819 = vsel %vm2790, %v2786, %v2522
      %v2820 = vsel %vm2790, %v2787, %v2524
      %v2821 = vsel %vm2790, %v2788, %v2526
      %v2822 = vsel %vm2790, %v2789, %v2528
      %v2823 = vld [vmem:[%s3] sm:$0xff]
      %v2824 = vld [vmem:[%s3 + $0x8] sm:$0xff]
      %v2825 = vld [vmem:[%s3 + $0x10] sm:$0x3]
      %v2826 = vld [vmem:[%s4] sm:$0x1]
      %v2828 = vperm.slane %v2826, 0
      %vm2830 = vcmask 146432
      %v2832 = vsel %vm2830, %v2791, 0
      %v2835 = vsel %vm2830, %v2792, 0
      %v2838 = vsel %vm2830, %v2793, 0
      %v2841 = vsel %vm2830, %v2794, 0
      %v2844 = vsel %vm2830, %v2795, 0
      %v2847 = vsel %vm2830, %v2796, 0
      %v2850 = vsel %vm2830, %v2797, 0
      %v2853 = vsel %vm2830, %v2798, 0
      %v2856 = vsel %vm2830, %v2799, 0
      %v2859 = vsel %vm2830, %v2800, 0
      %v2862 = vsel %vm2830, %v2801, 0
      %v2865 = vsel %vm2830, %v2802, 0
      %v2868 = vsel %vm2830, %v2803, 0
      %v2871 = vsel %vm2830, %v2804, 0
      %v2874 = vsel %vm2830, %v2805, 0
      %v2877 = vsel %vm2830, %v2806, 0
      %v2880 = vsel %vm2830, %v2807, 0
      %v2883 = vsel %vm2830, %v2808, 0
      %v2886 = vsel %vm2830, %v2809, 0
      %v2889 = vsel %vm2830, %v2810, 0
      %v2892 = vsel %vm2830, %v2811, 0
      %v2895 = vsel %vm2830, %v2812, 0
      %v2898 = vsel %vm2830, %v2813, 0
      %v2901 = vsel %vm2830, %v2814, 0
      %v2904 = vsel %vm2830, %v2815, 0
      %v2907 = vsel %vm2830, %v2816, 0
      %v2910 = vsel %vm2830, %v2817, 0
      %v2913 = vsel %vm2830, %v2818, 0
      %v2916 = vsel %vm2830, %v2819, 0
      %v2919 = vsel %vm2830, %v2820, 0
      %v2922 = vsel %vm2830, %v2821, 0
      %v2925 = vsel %vm2830, %v2822, 0
      %vm2927 = vcmask 1041408
      %v2929 = vsel %vm2927, %v2825, 0
      %2931 = vmatpush.msra.mxu0 0.0
      %2932 = vmatpush.msra.mxu0 0.0
      %2933 = vmatpush.msra.mxu0 0.0
      %2934 = vmatpush.msra.mxu0 0.0
      %2935 = vmatpush.msra.mxu0 0.0
      %2936 = vmatpush.msra.mxu0 0.0
      %2937 = vmatpush.msra.mxu0 0.0
      %2938 = vmatpush.msra.mxu0 0.0
      %2939 = vmatpush.msra.mxu0 0.0
      %2940 = vmatpush.msra.mxu0 0.0
      %2941 = vmatpush.msra.mxu0 0.0
      %2942 = vmatpush.msra.mxu0 0.0
      %2943 = vmatpush.msra.mxu0 0.0
      %2944 = vmatpush.msra.mxu0 %v2929
      %2945 = vmatpush.msra.mxu0 %v2824
      %2946 = vmatpush.msra.mxu0 %v2823
      %2947 = vmatmul.f32.gmra.mxu0 %v2832
      %v2948 = vpop.f32.mrf.mxu0
      %v2949 = vadd.f32 %v2828, %v2948
      %2950 = vmatmul.f32.gmra.mxu0 %v2835
      %v2951 = vpop.f32.mrf.mxu0
      %v2952 = vadd.f32 %v2828, %v2951
      %2953 = vmatmul.f32.gmra.mxu0 %v2838
      %v2954 = vpop.f32.mrf.mxu0
      %v2955 = vadd.f32 %v2828, %v2954
      %2956 = vmatmul.f32.gmra.mxu0 %v2841
      %v2957 = vpop.f32.mrf.mxu0
      %v2958 = vadd.f32 %v2828, %v2957
      %2959 = vmatmul.f32.gmra.mxu0 %v2844
      %v2960 = vpop.f32.mrf.mxu0
      %v2961 = vadd.f32 %v2828, %v2960
      %2962 = vmatmul.f32.gmra.mxu0 %v2847
      %v2963 = vpop.f32.mrf.mxu0
      %v2964 = vadd.f32 %v2828, %v2963
      %2965 = vmatmul.f32.gmra.mxu0 %v2850
      %v2966 = vpop.f32.mrf.mxu0
      %v2967 = vadd.f32 %v2828, %v2966
      %2968 = vmatmul.f32.gmra.mxu0 %v2853
      %v2969 = vpop.f32.mrf.mxu0
      %v2970 = vadd.f32 %v2828, %v2969
      %2971 = vmatmul.f32.gmra.mxu0 %v2856
      %v2972 = vpop.f32.mrf.mxu0
      %v2973 = vadd.f32 %v2828, %v2972
      %2974 = vmatmul.f32.gmra.mxu0 %v2859
      %v2975 = vpop.f32.mrf.mxu0
      %v2976 = vadd.f32 %v2828, %v2975
      %2977 = vmatmul.f32.gmra.mxu0 %v2862
      %v2978 = vpop.f32.mrf.mxu0
      %v2979 = vadd.f32 %v2828, %v2978
      %2980 = vmatmul.f32.gmra.mxu0 %v2865
      %v2981 = vpop.f32.mrf.mxu0
      %v2982 = vadd.f32 %v2828, %v2981
      %2983 = vmatmul.f32.gmra.mxu0 %v2868
      %v2984 = vpop.f32.mrf.mxu0
      %v2985 = vadd.f32 %v2828, %v2984
      %2986 = vmatmul.f32.gmra.mxu0 %v2871
      %v2987 = vpop.f32.mrf.mxu0
      %v2988 = vadd.f32 %v2828, %v2987
      %2989 = vmatmul.f32.gmra.mxu0 %v2874
      %v2990 = vpop.f32.mrf.mxu0
      %v2991 = vadd.f32 %v2828, %v2990
      %2992 = vmatmul.f32.gmra.mxu0 %v2877
      %v2993 = vpop.f32.mrf.mxu0
      %v2994 = vadd.f32 %v2828, %v2993
      %2995 = vmatmul.f32.gmra.mxu0 %v2880
      %v2996 = vpop.f32.mrf.mxu0
      %v2997 = vadd.f32 %v2828, %v2996
      %2998 = vmatmul.f32.gmra.mxu0 %v2883
      %v2999 = vpop.f32.mrf.mxu0
      %v3000 = vadd.f32 %v2828, %v2999
      %3001 = vmatmul.f32.gmra.mxu0 %v2886
      %v3002 = vpop.f32.mrf.mxu0
      %v3003 = vadd.f32 %v2828, %v3002
      %3004 = vmatmul.f32.gmra.mxu0 %v2889
      %v3005 = vpop.f32.mrf.mxu0
      %v3006 = vadd.f32 %v2828, %v3005
      %3007 = vmatmul.f32.gmra.mxu0 %v2892
      %v3008 = vpop.f32.mrf.mxu0
      %v3009 = vadd.f32 %v2828, %v3008
      %3010 = vmatmul.f32.gmra.mxu0 %v2895
      %v3011 = vpop.f32.mrf.mxu0
      %v3012 = vadd.f32 %v2828, %v3011
      %3013 = vmatmul.f32.gmra.mxu0 %v2898
      %v3014 = vpop.f32.mrf.mxu0
      %v3015 = vadd.f32 %v2828, %v3014
      %3016 = vmatmul.f32.gmra.mxu0 %v2901
      %v3017 = vpop.f32.mrf.mxu0
      %v3018 = vadd.f32 %v2828, %v3017
      %3019 = vmatmul.f32.gmra.mxu0 %v2904
      %v3020 = vpop.f32.mrf.mxu0
      %v3021 = vadd.f32 %v2828, %v3020
      %3022 = vmatmul.f32.gmra.mxu0 %v2907
      %v3023 = vpop.f32.mrf.mxu0
      %v3024 = vadd.f32 %v2828, %v3023
      %3025 = vmatmul.f32.gmra.mxu0 %v2910
      %v3026 = vpop.f32.mrf.mxu0
      %v3027 = vadd.f32 %v2828, %v3026
      %3028 = vmatmul.f32.gmra.mxu0 %v2913
      %v3029 = vpop.f32.mrf.mxu0
      %v3030 = vadd.f32 %v2828, %v3029
      %3031 = vmatmul.f32.gmra.mxu0 %v2916
      %v3032 = vpop.f32.mrf.mxu0
      %v3033 = vadd.f32 %v2828, %v3032
      %3034 = vmatmul.f32.gmra.mxu0 %v2919
      %v3035 = vpop.f32.mrf.mxu0
      %v3036 = vadd.f32 %v2828, %v3035
      %3037 = vmatmul.f32.gmra.mxu0 %v2922
      %v3038 = vpop.f32.mrf.mxu0
      %v3039 = vadd.f32 %v2828, %v3038
      %3040 = vmatmul.f32.gmra.mxu0 %v2925
      %v3041 = vpop.f32.mrf.mxu0
      %v3042 = vadd.f32 %v2828, %v3041
      %3043 = vdwg.mxu0
      %v3044 = vsub.f32 0.0, %v2949
      %v3045 = vsub.f32 0.0, %v2952
      %v3046 = vsub.f32 0.0, %v2955
      %v3047 = vsub.f32 0.0, %v2958
      %v3048 = vsub.f32 0.0, %v2961
      %v3049 = vsub.f32 0.0, %v2964
      %v3050 = vsub.f32 0.0, %v2967
      %v3051 = vsub.f32 0.0, %v2970
      %v3052 = vsub.f32 0.0, %v2973
      %v3053 = vsub.f32 0.0, %v2976
      %v3054 = vsub.f32 0.0, %v2979
      %v3055 = vsub.f32 0.0, %v2982
      %v3056 = vsub.f32 0.0, %v2985
      %v3057 = vsub.f32 0.0, %v2988
      %v3058 = vsub.f32 0.0, %v2991
      %v3059 = vsub.f32 0.0, %v2994
      %v3060 = vsub.f32 0.0, %v2997
      %v3061 = vsub.f32 0.0, %v3000
      %v3062 = vsub.f32 0.0, %v3003
      %v3063 = vsub.f32 0.0, %v3006
      %v3064 = vsub.f32 0.0, %v3009
      %v3065 = vsub.f32 0.0, %v3012
      %v3066 = vsub.f32 0.0, %v3015
      %v3067 = vsub.f32 0.0, %v3018
      %v3068 = vsub.f32 0.0, %v3021
      %v3069 = vsub.f32 0.0, %v3024
      %v3070 = vsub.f32 0.0, %v3027
      %v3071 = vsub.f32 0.0, %v3030
      %v3072 = vsub.f32 0.0, %v3033
      %v3073 = vsub.f32 0.0, %v3036
      %v3074 = vsub.f32 0.0, %v3039
      %v3075 = vsub.f32 0.0, %v3042
      %v3076 = vmul.f32 %v3044, 1.442695
      %v3077 = vpow.pop %v3076
      %v3078 = vmul.f32 %v3045, 1.442695
      %v3079 = vpow.pop %v3078
      %v3080 = vmul.f32 %v3046, 1.442695
      %v3081 = vpow.pop %v3080
      %v3082 = vmul.f32 %v3047, 1.442695
      %v3083 = vpow.pop %v3082
      %v3084 = vmul.f32 %v3048, 1.442695
      %v3085 = vpow.pop %v3084
      %v3086 = vmul.f32 %v3049, 1.442695
      %v3087 = vpow.pop %v3086
      %v3088 = vmul.f32 %v3050, 1.442695
      %v3089 = vpow.pop %v3088
      %v3090 = vmul.f32 %v3051, 1.442695
      %v3091 = vpow.pop %v3090
      %v3092 = vmul.f32 %v3052, 1.442695
      %v3093 = vpow.pop %v3092
      %v3094 = vmul.f32 %v3053, 1.442695
      %v3095 = vpow.pop %v3094
      %v3096 = vmul.f32 %v3054, 1.442695
      %v3097 = vpow.pop %v3096
      %v3098 = vmul.f32 %v3055, 1.442695
      %v3099 = vpow.pop %v3098
      %v3100 = vmul.f32 %v3056, 1.442695
      %v3101 = vpow.pop %v3100
      %v3102 = vmul.f32 %v3057, 1.442695
      %v3103 = vpow.pop %v3102
      %v3104 = vmul.f32 %v3058, 1.442695
      %v3105 = vpow.pop %v3104
      %v3106 = vmul.f32 %v3059, 1.442695
      %v3107 = vpow.pop %v3106
      %v3108 = vmul.f32 %v3060, 1.442695
      %v3109 = vpow.pop %v3108
      %v3110 = vmul.f32 %v3061, 1.442695
      %v3111 = vpow.pop %v3110
      %v3112 = vmul.f32 %v3062, 1.442695
      %v3113 = vpow.pop %v3112
      %v3114 = vmul.f32 %v3063, 1.442695
      %v3115 = vpow.pop %v3114
      %v3116 = vmul.f32 %v3064, 1.442695
      %v3117 = vpow.pop %v3116
      %v3118 = vmul.f32 %v3065, 1.442695
      %v3119 = vpow.pop %v3118
      %v3120 = vmul.f32 %v3066, 1.442695
      %v3121 = vpow.pop %v3120
      %v3122 = vmul.f32 %v3067, 1.442695
      %v3123 = vpow.pop %v3122
      %v3124 = vmul.f32 %v3068, 1.442695
      %v3125 = vpow.pop %v3124
      %v3126 = vmul.f32 %v3069, 1.442695
      %v3127 = vpow.pop %v3126
      %v3128 = vmul.f32 %v3070, 1.442695
      %v3129 = vpow.pop %v3128
      %v3130 = vmul.f32 %v3071, 1.442695
      %v3131 = vpow.pop %v3130
      %v3132 = vmul.f32 %v3072, 1.442695
      %v3133 = vpow.pop %v3132
      %v3134 = vmul.f32 %v3073, 1.442695
      %v3135 = vpow.pop %v3134
      %v3136 = vmul.f32 %v3074, 1.442695
      %v3137 = vpow.pop %v3136
      %v3138 = vmul.f32 %v3075, 1.442695
      %v3139 = vpow.pop %v3138
      %v3140 = vadd.f32 %v3077, 1.0
      %v3141 = vadd.f32 %v3079, 1.0
      %v3142 = vadd.f32 %v3081, 1.0
      %v3143 = vadd.f32 %v3083, 1.0
      %v3144 = vadd.f32 %v3085, 1.0
      %v3145 = vadd.f32 %v3087, 1.0
      %v3146 = vadd.f32 %v3089, 1.0
      %v3147 = vadd.f32 %v3091, 1.0
      %v3148 = vadd.f32 %v3093, 1.0
      %v3149 = vadd.f32 %v3095, 1.0
      %v3150 = vadd.f32 %v3097, 1.0
      %v3151 = vadd.f32 %v3099, 1.0
      %v3152 = vadd.f32 %v3101, 1.0
      %v3153 = vadd.f32 %v3103, 1.0
      %v3154 = vadd.f32 %v3105, 1.0
      %v3155 = vadd.f32 %v3107, 1.0
      %v3156 = vadd.f32 %v3109, 1.0
      %v3157 = vadd.f32 %v3111, 1.0
      %v3158 = vadd.f32 %v3113, 1.0
      %v3159 = vadd.f32 %v3115, 1.0
      %v3160 = vadd.f32 %v3117, 1.0
      %v3161 = vadd.f32 %v3119, 1.0
      %v3162 = vadd.f32 %v3121, 1.0
      %v3163 = vadd.f32 %v3123, 1.0
      %v3164 = vadd.f32 %v3125, 1.0
      %v3165 = vadd.f32 %v3127, 1.0
      %v3166 = vadd.f32 %v3129, 1.0
      %v3167 = vadd.f32 %v3131, 1.0
      %v3168 = vadd.f32 %v3133, 1.0
      %v3169 = vadd.f32 %v3135, 1.0
      %v3170 = vadd.f32 %v3137, 1.0
      %v3171 = vadd.f32 %v3139, 1.0
      %v3172 = vrcp.pop %v3140
      %v3173 = vrcp.pop %v3141
      %v3174 = vrcp.pop %v3142
      %v3175 = vrcp.pop %v3143
      %v3176 = vrcp.pop %v3144
      %v3177 = vrcp.pop %v3145
      %v3178 = vrcp.pop %v3146
      %v3179 = vrcp.pop %v3147
      %v3180 = vrcp.pop %v3148
      %v3181 = vrcp.pop %v3149
      %v3182 = vrcp.pop %v3150
      %v3183 = vrcp.pop %v3151
      %v3184 = vrcp.pop %v3152
      %v3185 = vrcp.pop %v3153
      %v3186 = vrcp.pop %v3154
      %v3187 = vrcp.pop %v3155
      %v3188 = vrcp.pop %v3156
      %v3189 = vrcp.pop %v3157
      %v3190 = vrcp.pop %v3158
      %v3191 = vrcp.pop %v3159
      %v3192 = vrcp.pop %v3160
      %v3193 = vrcp.pop %v3161
      %v3194 = vrcp.pop %v3162
      %v3195 = vrcp.pop %v3163
      %v3196 = vrcp.pop %v3164
      %v3197 = vrcp.pop %v3165
      %v3198 = vrcp.pop %v3166
      %v3199 = vrcp.pop %v3167
      %v3200 = vrcp.pop %v3168
      %v3201 = vrcp.pop %v3169
      %v3202 = vrcp.pop %v3170
      %v3203 = vrcp.pop %v3171
      %v3204 = vmul.f32 %v2949, %v3172
      %v3205 = vmul.f32 %v2952, %v3173
      %v3206 = vmul.f32 %v2955, %v3174
      %v3207 = vmul.f32 %v2958, %v3175
      %v3208 = vmul.f32 %v2961, %v3176
      %v3209 = vmul.f32 %v2964, %v3177
      %v3210 = vmul.f32 %v2967, %v3178
      %v3211 = vmul.f32 %v2970, %v3179
      %v3212 = vmul.f32 %v2973, %v3180
      %v3213 = vmul.f32 %v2976, %v3181
      %v3214 = vmul.f32 %v2979, %v3182
      %v3215 = vmul.f32 %v2982, %v3183
      %v3216 = vmul.f32 %v2985, %v3184
      %v3217 = vmul.f32 %v2988, %v3185
      %v3218 = vmul.f32 %v2991, %v3186
      %v3219 = vmul.f32 %v2994, %v3187
      %v3220 = vmul.f32 %v2997, %v3188
      %v3221 = vmul.f32 %v3000, %v3189
      %v3222 = vmul.f32 %v3003, %v3190
      %v3223 = vmul.f32 %v3006, %v3191
      %v3224 = vmul.f32 %v3009, %v3192
      %v3225 = vmul.f32 %v3012, %v3193
      %v3226 = vmul.f32 %v3015, %v3194
      %v3227 = vmul.f32 %v3018, %v3195
      %v3228 = vmul.f32 %v3021, %v3196
      %v3229 = vmul.f32 %v3024, %v3197
      %v3230 = vmul.f32 %v3027, %v3198
      %v3231 = vmul.f32 %v3030, %v3199
      %v3232 = vmul.f32 %v3033, %v3200
      %v3233 = vmul.f32 %v3036, %v3201
      %v3234 = vmul.f32 %v3039, %v3202
      %v3235 = vmul.f32 %v3042, %v3203
      %v3236 = vadd.f32 %v3204, %v279
      %v3237 = vadd.f32 %v3205, %v280
      %v3238 = vadd.f32 %v3206, %v281
      %v3239 = vadd.f32 %v3207, %v282
      %v3240 = vadd.f32 %v3208, %v283
      %v3241 = vadd.f32 %v3209, %v284
      %v3242 = vadd.f32 %v3210, %v285
      %v3243 = vadd.f32 %v3211, %v286
      %v3244 = vadd.f32 %v3212, %v287
      %v3245 = vadd.f32 %v3213, %v288
      %v3246 = vadd.f32 %v3214, %v289
      %v3247 = vadd.f32 %v3215, %v290
      %v3248 = vadd.f32 %v3216, %v291
      %v3249 = vadd.f32 %v3217, %v292
      %v3250 = vadd.f32 %v3218, %v293
      %v3251 = vadd.f32 %v3219, %v294
      %v3252 = vadd.f32 %v3220, %v295
      %v3253 = vadd.f32 %v3221, %v296
      %v3254 = vadd.f32 %v3222, %v297
      %v3255 = vadd.f32 %v3223, %v298
      %v3256 = vadd.f32 %v3224, %v299
      %v3257 = vadd.f32 %v3225, %v300
      %v3258 = vadd.f32 %v3226, %v301
      %v3259 = vadd.f32 %v3227, %v302
      %v3260 = vadd.f32 %v3228, %v303
      %v3261 = vadd.f32 %v3229, %v304
      %v3262 = vadd.f32 %v3230, %v305
      %v3263 = vadd.f32 %v3231, %v306
      %v3264 = vadd.f32 %v3232, %v307
      %v3265 = vadd.f32 %v3233, %v308
      %v3266 = vadd.f32 %v3234, %v309
      %v3267 = vadd.f32 %v3235, %v310
      %3268 = vst.msk [vmem:[%s278] sm:$0xff] %vm316, %v3236
      %3269 = vst.msk [vmem:[%s278 + $0x8] sm:$0xff] %vm316, %v3237
      %3270 = vst.msk [vmem:[%s278 + $0x10] sm:$0xff] %vm316, %v3238
      %3271 = vst.msk [vmem:[%s278 + $0x18] sm:$0xff] %vm316, %v3239
      %3272 = vst.msk [vmem:[%s278 + $0x20] sm:$0xff] %vm316, %v3240
      %3273 = vst.msk [vmem:[%s278 + $0x28] sm:$0xff] %vm316, %v3241
      %3274 = vst.msk [vmem:[%s278 + $0x30] sm:$0xff] %vm316, %v3242
      %3275 = vst.msk [vmem:[%s278 + $0x38] sm:$0xff] %vm316, %v3243
      %3276 = vst.msk [vmem:[%s278 + $0x40] sm:$0xff] %vm316, %v3244
      %3277 = vst.msk [vmem:[%s278 + $0x48] sm:$0xff] %vm316, %v3245
      %3278 = vst.msk [vmem:[%s278 + $0x50] sm:$0xff] %vm316, %v3246
      %3279 = vst.msk [vmem:[%s278 + $0x58] sm:$0xff] %vm316, %v3247
      %3280 = vst.msk [vmem:[%s278 + $0x60] sm:$0xff] %vm316, %v3248
      %3281 = vst.msk [vmem:[%s278 + $0x68] sm:$0xff] %vm316, %v3249
      %3282 = vst.msk [vmem:[%s278 + $0x70] sm:$0xff] %vm316, %v3250
      %3283 = vst.msk [vmem:[%s278 + $0x78] sm:$0xff] %vm316, %v3251
      %3284 = vst.msk [vmem:[%s278 + $0x80] sm:$0xff] %vm316, %v3252
      %3285 = vst.msk [vmem:[%s278 + $0x88] sm:$0xff] %vm316, %v3253
      %3286 = vst.msk [vmem:[%s278 + $0x90] sm:$0xff] %vm316, %v3254
      %3287 = vst.msk [vmem:[%s278 + $0x98] sm:$0xff] %vm316, %v3255
      %3288 = vst.msk [vmem:[%s278 + $0xa0] sm:$0xff] %vm316, %v3256
      %3289 = vst.msk [vmem:[%s278 + $0xa8] sm:$0xff] %vm316, %v3257
      %3290 = vst.msk [vmem:[%s278 + $0xb0] sm:$0xff] %vm316, %v3258
      %3291 = vst.msk [vmem:[%s278 + $0xb8] sm:$0xff] %vm316, %v3259
      %3292 = vst.msk [vmem:[%s278 + $0xc0] sm:$0xff] %vm316, %v3260
      %3293 = vst.msk [vmem:[%s278 + $0xc8] sm:$0xff] %vm316, %v3261
      %3294 = vst.msk [vmem:[%s278 + $0xd0] sm:$0xff] %vm316, %v3262
      %3295 = vst.msk [vmem:[%s278 + $0xd8] sm:$0xff] %vm316, %v3263
      %3296 = vst.msk [vmem:[%s278 + $0xe0] sm:$0xff] %vm316, %v3264
      %3297 = vst.msk [vmem:[%s278 + $0xe8] sm:$0xff] %vm316, %v3265
      %3298 = vst.msk [vmem:[%s278 + $0xf0] sm:$0xff] %vm316, %v3266
      %3299 = vst.msk [vmem:[%s278 + $0xf8] sm:$0xff] %vm316, %v3267
      %p3300 = scmp.lt.s32.totalorder %s18, 1
      %s3301 = scalar_select %p3300, %s18, 1
      %s3302 = smul.addr %s3301, 32
      %s3303 = smul.addr %s3302, 8
      %s3304 = scalar_lea.vmem %s7, %s3303
      // Predicated region
      $region49: #{tpu_custom_call.1} parent=47 // pred_check
        %p3305 = pneg %p188
      $region50: #{tpu_custom_call.1} parent=47 // pred_check_branch
        %3307 = sbr.rel (%p3305) target = $region52
      $region51: #{tpu_custom_call.1} parent=47 // pred_region
        _
      $region52: #{tpu_custom_call.1} parent=47 // pred_fallthru
        _
    $region48: #{tpu_custom_call.1} parent=5 // pred_fallthru
      _
    %p3308 = scmp.le.s32.totalorder 2, %s13
    // Predicated region
    $region53: #{tpu_custom_call.1} parent=5 // pred_check
      %p3309 = pneg %p3308
    $region54: #{tpu_custom_call.1} parent=5 // pred_check_branch
      %3311 = sbr.rel (%p3309) target = $region56
    $region55: #{tpu_custom_call.1} parent=5 // pred_region
      %s3312 = ssub.s32 %s13, 2
      // Predicated region
      $region57: #{tpu_custom_call.1} parent=55 // pred_check
        %p3313 = pneg %p194
      $region58: #{tpu_custom_call.1} parent=55 // pred_check_branch
        %3315 = sbr.rel (%p3313) target = $region60
      $region59: #{tpu_custom_call.1} parent=55 // pred_region
        %p3316 = scmp.lt.s32.totalorder %s19, 1
        %s3317 = scalar_select %p3316, %s19, 1
        %s3318 = smul.addr %s3317, 32
        %s3319 = smul.addr %s3318, 8
        %s3320 = scalar_lea.vmem %s7, %s3319
      $region60: #{tpu_custom_call.1} parent=55 // pred_fallthru
        _
    $region56: #{tpu_custom_call.1} parent=5 // pred_fallthru
      _
  $region6: #{tpu_custom_call.1} parent=0 // loop_footer
    %s17 = sadd.s32 1, %s13
  $region7: #{tpu_custom_call.1} parent=0 // loop_footer_branch
    %12 = sbr.rel target = $region3
  $region8: #{tpu_custom_call.1} parent=0 // loop_exit
    _

</llo_original>
